<compile_context>
chip_gen: v7x
topology: tpu7x:2x2x1
jax: 0.10.0
libtpu: 0.0.40
codegen_flags: <defaults>
</compile_context>

<pallas_src>
import math

import jax
import jax.numpy as jnp
from jax.experimental import pallas as pl
from jax.experimental.pallas import tpu as pltpu


# ---------------------------------------------------------------------------
# Pallas kernel
# ---------------------------------------------------------------------------
def make_encoder_kernel(Bt, L, P, H, n_layers, K, mxu_dtype):
    pad = (K - 1) // 2
    scale = math.sqrt(0.5)  # torch.sqrt(FloatTensor([0.5]))
    ln_eps = 1e-5
    inv_H = 1.0 / H
    M = Bt * L  # batch folded into the matmul M dimension

    def kernel(x_ref, fcw_ref, fcb_ref, cwa_ref, cwg_ref, cba_ref, cbg_ref,
               gamma_ref, beta_ref, o_ref, pad_ref):
        # ---- fc: protein_dim -> hid_dim, (Bt*L, P) @ (P, H) on the MXU ----
        x = x_ref[...].reshape(M, P).astype(mxu_dtype)
        h = jnp.dot(x, fcw_ref[...], preferred_element_type=jnp.float32)
        h = h + fcb_ref[...]                     # (M, H) f32 residual stream

        # zero the conv "same"-padding rows of the persistent scratch once
        if pad > 0:
            pad_ref[:, :pad, :] = jnp.zeros((Bt, pad, H), mxu_dtype)
            pad_ref[:, L + pad:, :] = jnp.zeros((Bt, pad, H), mxu_dtype)

        for layer in range(n_layers):
            hc = h.astype(mxu_dtype)             # (M, H) MXU operand, in registers

            # Conv1d(H -> 2H) as K shifted matmuls; value/gate halves are kept
            # as separate accumulators (no lane-offset slice of a (·,2H) tile).
            # Center tap (k == pad) uses `hc` directly — no VMEM round-trip.
            a_acc = jnp.dot(hc, cwa_ref[layer, pad],
                            preferred_element_type=jnp.float32)
            g_acc = jnp.dot(hc, cwg_ref[layer, pad],
                            preferred_element_type=jnp.float32)

            if K > 1:
                # write current activations into the padded scratch interior
                pad_ref[:, pad:pad + L, :] = hc.reshape(Bt, L, H)
                xp = pad_ref[...]                # (Bt, L + 2*pad, H)
                for k in range(K):
                    if k == pad:
                        continue
                    win = xp[:, k:k + L, :].reshape(M, H)
                    a_acc = a_acc + jnp.dot(win, cwa_ref[layer, k],
                                            preferred_element_type=jnp.float32)
                    g_acc = g_acc + jnp.dot(win, cwg_ref[layer, k],
                                            preferred_element_type=jnp.float32)

            a_acc = a_acc + cba_ref[layer]       # (M, H)
            g_acc = g_acc + cbg_ref[layer]       # (M, H)

            # GLU (sigmoid on EUP) + residual + sqrt(0.5) scaling, all f32
            h = (a_acc * jax.nn.sigmoid(g_acc) + h) * scale

        # ---- LayerNorm over hid_dim: fused single-pass statistics ----
        s = jnp.sum(h, axis=-1, keepdims=True)
        s2 = jnp.sum(h * h, axis=-1, keepdims=True)
        mean = s * inv_H
        var = jnp.maximum(s2 * inv_H - mean * mean, 0.0)
        y = (h - mean) * jax.lax.rsqrt(var + ln_eps) * gamma_ref[...] + beta_ref[...]

        o_ref[...] = y.reshape(Bt, L, H).astype(o_ref.dtype)

    return kernel


def _pick_batch_tile(B, max_bt=8):
    """Largest divisor of B that is <= max_bt, preferring a grid of >= 2 steps
    (so both v7x TensorCores get work)."""
    divisors = [d for d in range(1, min(B, max_bt) + 1) if B % d == 0]
    for d in reversed(divisors):
        if B // d >= 2:
            return d
    return divisors[-1]


def encoder_forward(protein, params, hid_dim, n_layers, kernel_size,
                    mxu_dtype=jnp.bfloat16, batch_tile=None):
    """protein: (B, L, protein_dim) float32 -> (B, L, hid_dim) float32."""
    B, L, P = protein.shape
    H = hid_dim
    K = kernel_size
    pad = (K - 1) // 2
    fcw, fcb, cw, cb, gamma, beta = params

    Bt = batch_tile if batch_tile is not None else _pick_batch_tile(B)
    assert B % Bt == 0, (B, Bt)

    # Host-side weight prep: split GLU value/gate halves (lane-aligned (·, H)
    # matmul outputs — no in-kernel slice at lane offset H) and cast the MXU
    # operands; biases / LN params stay f32.
    cwa = cw[..., :H].astype(mxu_dtype)          # (n_layers, K, H, H)
    cwg = cw[..., H:].astype(mxu_dtype)          # (n_layers, K, H, H)
    cba = cb[..., :H].astype(jnp.float32)        # (n_layers, 1, H)
    cbg = cb[..., H:].astype(jnp.float32)        # (n_layers, 1, H)
    fcw_m = fcw.astype(mxu_dtype)                # (P, H)

    kernel = make_encoder_kernel(Bt, L, P, H, n_layers, K, mxu_dtype)

    def full_spec(shape):
        nd = len(shape)
        return pl.BlockSpec(shape, lambda b, _nd=nd: (0,) * _nd)

    # Rough VMEM budget (resident weights + double-buffered blocks + scratch),
    # with headroom; floor at the default scoped limit so small shapes are safe.
    itemsize = jnp.dtype(mxu_dtype).itemsize
    resident_bytes = ((P * H + 2 * n_layers * K * H * H) * itemsize
                      + (H + 2 * n_layers * H + 2 * H) * 4)
    block_bytes = 2 * (Bt * L * P + Bt * L * H) * 4
    scratch_bytes = Bt * (L + 2 * pad) * H * itemsize
    vmem_limit = int(min(max(2 * (resident_bytes + block_bytes + scratch_bytes),
                             32 * 1024 * 1024),
                         48 * 1024 * 1024))

    # Advisory cost estimate (helps XLA schedule around the custom call).
    flops = (2 * B * L * P * H
             + 4 * n_layers * K * B * L * H * H
             + 8 * n_layers * B * L * H
             + 8 * B * L * H)
    transcendentals = n_layers * B * L * H + B * L
    bytes_accessed = (B * L * P * 4 + B * L * H * 4
                      + (P * H + 2 * n_layers * K * H * H) * itemsize
                      + (H + 2 * n_layers * H + 2 * H) * 4)
    cost = pl.CostEstimate(flops=int(flops),
                           transcendentals=int(transcendentals),
                           bytes_accessed=int(bytes_accessed))

    return pl.pallas_call(
        kernel,
        out_shape=jax.ShapeDtypeStruct((B, L, H), jnp.float32),
        grid=(B // Bt,),
        in_specs=[
            pl.BlockSpec((Bt, L, P), lambda b: (b, 0, 0)),  # protein block
            full_spec(fcw_m.shape),   # (P, H)
            full_spec(fcb.shape),     # (1, H)
            full_spec(cwa.shape),     # (n_layers, K, H, H)
            full_spec(cwg.shape),     # (n_layers, K, H, H)
            full_spec(cba.shape),     # (n_layers, 1, H)
            full_spec(cbg.shape),     # (n_layers, 1, H)
            full_spec(gamma.shape),   # (1, H)
            full_spec(beta.shape),    # (1, H)
        ],
        out_specs=pl.BlockSpec((Bt, L, H), lambda b: (b, 0, 0)),
        scratch_shapes=[pltpu.VMEM((Bt, L + 2 * pad, H), mxu_dtype)],
        compiler_params=pltpu.CompilerParams(
            dimension_semantics=("parallel",),
            vmem_limit_bytes=vmem_limit,
        ),
        cost_estimate=cost,
    )(protein, fcw_m, fcb, cwa, cwg, cba, cbg, gamma, beta)


# ---------------------------------------------------------------------------
# Pure-JAX reference (lax.conv_general_dilated, mirrors PyTorch semantics).
# `mxu_dtype` only affects the matmul/conv operand dtype (accumulation is f32),
# so the same function provides both the exact f32 reference and a bf16-matched
# reference for the fast kernel path.
# ---------------------------------------------------------------------------
def encoder_reference(protein, params, hid_dim, n_layers, kernel_size,
                      mxu_dtype=jnp.float32):
    fcw, fcb, cw, cb, gamma, beta = params
    H = hid_dim
    K = kernel_size
    pad = (K - 1) // 2
    scale = math.sqrt(0.5)

    x = jnp.dot(protein.astype(mxu_dtype), fcw.astype(mxu_dtype),
                preferred_element_type=jnp.float32) + fcb   # (B, L, H)
    h = jnp.transpose(x, (0, 2, 1))                         # (B, H, L) == permute(0,2,1)
    for layer in range(n_layers):
        # reconstruct torch Conv1d weight: W[co, ci, k] = cw[layer, k, ci, co]
        w = jnp.transpose(cw[layer], (2, 1, 0)).astype(mxu_dtype)  # (2H, H, K)
        conved = jax.lax.conv_general_dilated(
            h.astype(mxu_dtype), w, window_strides=(1,), padding=[(pad, pad)],
            dimension_numbers=("NCW", "OIW", "NCW"),
            preferred_element_type=jnp.float32,
        ) + cb[layer].reshape(1, 2 * H, 1)
        a, g = conved[:, :H, :], conved[:, H:, :]
        glu = a * jax.nn.sigmoid(g)
        h = (glu + h) * scale
    y = jnp.transpose(h, (0, 2, 1))                         # (B, L, H)
    mean = jnp.mean(y, axis=-1, keepdims=True)
    var = jnp.mean((y - mean) ** 2, axis=-1, keepdims=True)
    return (y - mean) * jax.lax.rsqrt(var + 1e-5) * gamma.reshape(1, 1, H) \
        + beta.reshape(1, 1, H)


# ---------------------------------------------------------------------------
# Deterministic parameter construction
# ---------------------------------------------------------------------------
def make_params(key, protein_dim, hid_dim, n_layers, kernel_size):
    P, H, K = protein_dim, hid_dim, kernel_size
    keys = jax.random.split(key, 8)
    fcw = 0.1 * jax.random.normal(keys[0], (P, H), jnp.float32)
    fcb = 0.1 * jax.random.normal(keys[1], (1, H), jnp.float32)
    # conv weights stored as (n_layers, K, C_in=H, C_out=2H) for matmul use
    cw = 0.1 * jax.random.normal(keys[2], (n_layers, K, H, 2 * H), jnp.float32)
    cb = 0.1 * jax.random.normal(keys[3], (n_layers, 1, 2 * H), jnp.float32)
    gamma = 1.0 + 0.05 * jax.random.normal(keys[4], (1, H), jnp.float32)
    beta = 0.05 * jax.random.normal(keys[5], (1, H), jnp.float32)
    return fcw, fcb, cw, cb, gamma, beta


# ---------------------------------------------------------------------------
# Main
# ---------------------------------------------------------------------------
if __name__ == "__main__":
    # small shapes consistent with the module
    B, L = 2, 16            # batch, sequence length
    protein_dim = 16        # self.input_dim
    hid_dim = 32            # self.hid_dim
    n_layers = 3
    kernel_size = 3         # must be odd

    key = jax.random.PRNGKey(0)
    k_in, k_par = jax.random.split(key)
    protein = jax.random.normal(k_in, (B, L, protein_dim), jnp.float32)
    params = make_params(k_par, protein_dim, hid_dim, n_layers, kernel_size)

    # 1) exact-semantics check: f32 MXU operands vs pure-JAX f32 reference
    out_f32 = jax.block_until_ready(
        encoder_forward(protein, params, hid_dim, n_layers, kernel_size,
                        mxu_dtype=jnp.float32))
    ref_f32 = jax.block_until_ready(
        encoder_reference(protein, params, hid_dim, n_layers, kernel_size,
                          mxu_dtype=jnp.float32))
    assert out_f32.shape == (B, L, hid_dim), out_f32.shape
    assert jnp.allclose(out_f32, ref_f32, atol=5e-4, rtol=5e-4), (
        float(jnp.max(jnp.abs(out_f32 - ref_f32))))

    # 2) fast path: bf16 MXU operands (f32 accumulation) vs bf16-matched reference
    out_bf16 = jax.block_until_ready(
        encoder_forward(protein, params, hid_dim, n_layers, kernel_size,
                        mxu_dtype=jnp.bfloat16))
    ref_bf16 = jax.block_until_ready(
        encoder_reference(protein, params, hid_dim, n_layers, kernel_size,
                          mxu_dtype=jnp.bfloat16))
    assert out_bf16.shape == (B, L, hid_dim), out_bf16.shape
    assert jnp.allclose(out_bf16, ref_bf16, atol=2e-3, rtol=2e-3), (
        float(jnp.max(jnp.abs(out_bf16 - ref_bf16))))

    print("KERNEL_OK")
</pallas_src>

<mosaic_0001>
module attributes {stable_mosaic.version = 11 : i64} {
  func.func @kernel(%arg0: i32, %arg1: memref<1x16x16xf32, #tpu.memory_space<vmem>>, %arg2: memref<16x32xf32, #tpu.memory_space<vmem>>, %arg3: memref<1x32xf32, #tpu.memory_space<vmem>>, %arg4: memref<3x3x32x32xf32, #tpu.memory_space<vmem>>, %arg5: memref<3x3x32x32xf32, #tpu.memory_space<vmem>>, %arg6: memref<3x1x32xf32, #tpu.memory_space<vmem>>, %arg7: memref<3x1x32xf32, #tpu.memory_space<vmem>>, %arg8: memref<1x32xf32, #tpu.memory_space<vmem>>, %arg9: memref<1x32xf32, #tpu.memory_space<vmem>>, %arg10: memref<1x16x32xf32, #tpu.memory_space<vmem>>, %arg11: memref<1x18x32xf32, #tpu.memory_space<vmem>>) attributes {dimension_semantics = [#tpu.dimension_semantics<parallel>], iteration_bounds = array<i64: 2>, scalar_prefetch = 0 : i64, scratch_operands = 1 : i64, tpu.core_type = #tpu.core_type<tc>, window_params = [{transform_indices = @transform_0, window_bounds = array<i64: 1, 16, 16>}, {pipeline_mode = #tpu.pipeline_mode<synchronous>, transform_indices = @transform_1, window_bounds = array<i64: 16, 32>}, {pipeline_mode = #tpu.pipeline_mode<synchronous>, transform_indices = @transform_2, window_bounds = array<i64: 1, 32>}, {pipeline_mode = #tpu.pipeline_mode<synchronous>, transform_indices = @transform_3, window_bounds = array<i64: 3, 3, 32, 32>}, {pipeline_mode = #tpu.pipeline_mode<synchronous>, transform_indices = @transform_4, window_bounds = array<i64: 3, 3, 32, 32>}, {pipeline_mode = #tpu.pipeline_mode<synchronous>, transform_indices = @transform_5, window_bounds = array<i64: 3, 1, 32>}, {pipeline_mode = #tpu.pipeline_mode<synchronous>, transform_indices = @transform_6, window_bounds = array<i64: 3, 1, 32>}, {pipeline_mode = #tpu.pipeline_mode<synchronous>, transform_indices = @transform_7, window_bounds = array<i64: 1, 32>}, {pipeline_mode = #tpu.pipeline_mode<synchronous>, transform_indices = @transform_8, window_bounds = array<i64: 1, 32>}, {transform_indices = @transform_9, window_bounds = array<i64: 1, 16, 32>}]} {
    %c0 = arith.constant 0 : index
    %c0_0 = arith.constant 0 : index
    %c0_1 = arith.constant 0 : index
    %0 = vector.load %arg1[%c0, %c0_0, %c0_1] : memref<1x16x16xf32, #tpu.memory_space<vmem>>, vector<1x16x16xf32>
    %1 = vector.shape_cast %0 : vector<1x16x16xf32> to vector<16x16xf32>
    %c0_2 = arith.constant 0 : index
    %c0_3 = arith.constant 0 : index
    %2 = vector.load %arg2[%c0_2, %c0_3] : memref<16x32xf32, #tpu.memory_space<vmem>>, vector<16x32xf32>
    %cst = arith.constant dense<0.000000e+00> : vector<16x32xf32>
    %3 = tpu.matmul %1, %2, %cst {dimension_numbers = #tpu.dot_dimension_numbers<[1], [0], [0], [1], [0, 0, 1, 1], [], []>} : vector<16x16xf32>, vector<16x32xf32>, vector<16x32xf32> -> vector<16x32xf32>
    %c0_4 = arith.constant 0 : index
    %c0_5 = arith.constant 0 : index
    %4 = vector.load %arg3[%c0_4, %c0_5] : memref<1x32xf32, #tpu.memory_space<vmem>>, vector<1x32xf32>
    %5 = vector.broadcast %4 : vector<1x32xf32> to vector<16x32xf32>
    %6 = arith.addf %3, %5 : vector<16x32xf32>
    %cst_6 = arith.constant 0.000000e+00 : f32
    %7 = vector.broadcast %cst_6 : f32 to vector<1x1x32xf32>
    %c0_7 = arith.constant 0 : index
    %c0_8 = arith.constant 0 : index
    %c0_9 = arith.constant 0 : index
    %8 = vector.load %arg11[%c0_7, %c0_8, %c0_9] : memref<1x18x32xf32, #tpu.memory_space<vmem>>, vector<1x1x32xf32>
    tpu.vector_store %arg11[%c0_7, %c0_8, %c0_9], %7 {strides = array<i32>} : memref<1x18x32xf32, #tpu.memory_space<vmem>>, vector<1x1x32xf32>,
    %cst_10 = arith.constant 0.000000e+00 : f32
    %9 = vector.broadcast %cst_10 : f32 to vector<1x1x32xf32>
    %c0_11 = arith.constant 0 : index
    %c17 = arith.constant 17 : index
    %c0_12 = arith.constant 0 : index
    %10 = vector.load %arg11[%c0_11, %c17, %c0_12] : memref<1x18x32xf32, #tpu.memory_space<vmem>>, vector<1x1x32xf32>
    tpu.vector_store %arg11[%c0_11, %c17, %c0_12], %9 {strides = array<i32>} : memref<1x18x32xf32, #tpu.memory_space<vmem>>, vector<1x1x32xf32>,
    %c0_13 = arith.constant 0 : index
    %c1 = arith.constant 1 : index
    %c0_14 = arith.constant 0 : index
    %c0_15 = arith.constant 0 : index
    %11 = vector.load %arg4[%c0_13, %c1, %c0_14, %c0_15] : memref<3x3x32x32xf32, #tpu.memory_space<vmem>>, vector<1x1x32x32xf32>
    %12 = vector.shape_cast %11 : vector<1x1x32x32xf32> to vector<32x32xf32>
    %cst_16 = arith.constant dense<0.000000e+00> : vector<16x32xf32>
    %13 = tpu.matmul %6, %12, %cst_16 {dimension_numbers = #tpu.dot_dimension_numbers<[1], [0], [0], [1], [0, 0, 1, 1], [], []>} : vector<16x32xf32>, vector<32x32xf32>, vector<16x32xf32> -> vector<16x32xf32>
    %c0_17 = arith.constant 0 : index
    %c1_18 = arith.constant 1 : index
    %c0_19 = arith.constant 0 : index
    %c0_20 = arith.constant 0 : index
    %14 = vector.load %arg5[%c0_17, %c1_18, %c0_19, %c0_20] : memref<3x3x32x32xf32, #tpu.memory_space<vmem>>, vector<1x1x32x32xf32>
    %15 = vector.shape_cast %14 : vector<1x1x32x32xf32> to vector<32x32xf32>
    %cst_21 = arith.constant dense<0.000000e+00> : vector<16x32xf32>
    %16 = tpu.matmul %6, %15, %cst_21 {dimension_numbers = #tpu.dot_dimension_numbers<[1], [0], [0], [1], [0, 0, 1, 1], [], []>} : vector<16x32xf32>, vector<32x32xf32>, vector<16x32xf32> -> vector<16x32xf32>
    %17 = vector.shape_cast %6 : vector<16x32xf32> to vector<1x16x32xf32>
    %c0_22 = arith.constant 0 : index
    %c1_23 = arith.constant 1 : index
    %c0_24 = arith.constant 0 : index
    %18 = vector.load %arg11[%c0_22, %c1_23, %c0_24] : memref<1x18x32xf32, #tpu.memory_space<vmem>>, vector<1x16x32xf32>
    tpu.vector_store %arg11[%c0_22, %c1_23, %c0_24], %17 {strides = array<i32>} : memref<1x18x32xf32, #tpu.memory_space<vmem>>, vector<1x16x32xf32>,
    %c0_25 = arith.constant 0 : index
    %c0_26 = arith.constant 0 : index
    %c0_27 = arith.constant 0 : index
    %19 = vector.load %arg11[%c0_25, %c0_26, %c0_27] : memref<1x18x32xf32, #tpu.memory_space<vmem>>, vector<1x18x32xf32>
    %20 = vector.extract_strided_slice %19 {offsets = [0, 0, 0], sizes = [1, 16, 32], strides = [1, 1, 1]} : vector<1x18x32xf32> to vector<1x16x32xf32>
    %21 = vector.shape_cast %20 : vector<1x16x32xf32> to vector<16x32xf32>
    %c0_28 = arith.constant 0 : index
    %c0_29 = arith.constant 0 : index
    %c0_30 = arith.constant 0 : index
    %c0_31 = arith.constant 0 : index
    %22 = vector.load %arg4[%c0_28, %c0_29, %c0_30, %c0_31] : memref<3x3x32x32xf32, #tpu.memory_space<vmem>>, vector<1x1x32x32xf32>
    %23 = vector.shape_cast %22 : vector<1x1x32x32xf32> to vector<32x32xf32>
    %cst_32 = arith.constant dense<0.000000e+00> : vector<16x32xf32>
    %24 = tpu.matmul %21, %23, %cst_32 {dimension_numbers = #tpu.dot_dimension_numbers<[1], [0], [0], [1], [0, 0, 1, 1], [], []>} : vector<16x32xf32>, vector<32x32xf32>, vector<16x32xf32> -> vector<16x32xf32>
    %25 = arith.addf %13, %24 : vector<16x32xf32>
    %c0_33 = arith.constant 0 : index
    %c0_34 = arith.constant 0 : index
    %c0_35 = arith.constant 0 : index
    %c0_36 = arith.constant 0 : index
    %26 = vector.load %arg5[%c0_33, %c0_34, %c0_35, %c0_36] : memref<3x3x32x32xf32, #tpu.memory_space<vmem>>, vector<1x1x32x32xf32>
    %27 = vector.shape_cast %26 : vector<1x1x32x32xf32> to vector<32x32xf32>
    %cst_37 = arith.constant dense<0.000000e+00> : vector<16x32xf32>
    %28 = tpu.matmul %21, %27, %cst_37 {dimension_numbers = #tpu.dot_dimension_numbers<[1], [0], [0], [1], [0, 0, 1, 1], [], []>} : vector<16x32xf32>, vector<32x32xf32>, vector<16x32xf32> -> vector<16x32xf32>
    %29 = arith.addf %16, %28 : vector<16x32xf32>
    %30 = vector.extract_strided_slice %19 {offsets = [0, 2, 0], sizes = [1, 16, 32], strides = [1, 1, 1]} : vector<1x18x32xf32> to vector<1x16x32xf32>
    %31 = vector.shape_cast %30 : vector<1x16x32xf32> to vector<16x32xf32>
    %c0_38 = arith.constant 0 : index
    %c2 = arith.constant 2 : index
    %c0_39 = arith.constant 0 : index
    %c0_40 = arith.constant 0 : index
    %32 = vector.load %arg4[%c0_38, %c2, %c0_39, %c0_40] : memref<3x3x32x32xf32, #tpu.memory_space<vmem>>, vector<1x1x32x32xf32>
    %33 = vector.shape_cast %32 : vector<1x1x32x32xf32> to vector<32x32xf32>
    %cst_41 = arith.constant dense<0.000000e+00> : vector<16x32xf32>
    %34 = tpu.matmul %31, %33, %cst_41 {dimension_numbers = #tpu.dot_dimension_numbers<[1], [0], [0], [1], [0, 0, 1, 1], [], []>} : vector<16x32xf32>, vector<32x32xf32>, vector<16x32xf32> -> vector<16x32xf32>
    %35 = arith.addf %25, %34 : vector<16x32xf32>
    %c0_42 = arith.constant 0 : index
    %c2_43 = arith.constant 2 : index
    %c0_44 = arith.constant 0 : index
    %c0_45 = arith.constant 0 : index
    %36 = vector.load %arg5[%c0_42, %c2_43, %c0_44, %c0_45] : memref<3x3x32x32xf32, #tpu.memory_space<vmem>>, vector<1x1x32x32xf32>
    %37 = vector.shape_cast %36 : vector<1x1x32x32xf32> to vector<32x32xf32>
    %cst_46 = arith.constant dense<0.000000e+00> : vector<16x32xf32>
    %38 = tpu.matmul %31, %37, %cst_46 {dimension_numbers = #tpu.dot_dimension_numbers<[1], [0], [0], [1], [0, 0, 1, 1], [], []>} : vector<16x32xf32>, vector<32x32xf32>, vector<16x32xf32> -> vector<16x32xf32>
    %39 = arith.addf %29, %38 : vector<16x32xf32>
    %c0_47 = arith.constant 0 : index
    %c0_48 = arith.constant 0 : index
    %c0_49 = arith.constant 0 : index
    %40 = vector.load %arg6[%c0_47, %c0_48, %c0_49] : memref<3x1x32xf32, #tpu.memory_space<vmem>>, vector<1x1x32xf32>
    %41 = vector.shape_cast %40 : vector<1x1x32xf32> to vector<1x32xf32>
    %42 = vector.broadcast %41 : vector<1x32xf32> to vector<16x32xf32>
    %43 = arith.addf %35, %42 : vector<16x32xf32>
    %c0_50 = arith.constant 0 : index
    %c0_51 = arith.constant 0 : index
    %c0_52 = arith.constant 0 : index
    %44 = vector.load %arg7[%c0_50, %c0_51, %c0_52] : memref<3x1x32xf32, #tpu.memory_space<vmem>>, vector<1x1x32xf32>
    %45 = vector.shape_cast %44 : vector<1x1x32xf32> to vector<1x32xf32>
    %46 = vector.broadcast %45 : vector<1x32xf32> to vector<16x32xf32>
    %47 = arith.addf %39, %46 : vector<16x32xf32>
    %48 = arith.negf %47 : vector<16x32xf32>
    %49 = math.exp %48 : vector<16x32xf32>
    %cst_53 = arith.constant 1.000000e+00 : f32
    %50 = vector.broadcast %cst_53 : f32 to vector<16x32xf32>
    %51 = arith.addf %50, %49 : vector<16x32xf32>
    %52 = arith.divf %50, %51 : vector<16x32xf32>
    %53 = arith.mulf %43, %52 : vector<16x32xf32>
    %54 = arith.addf %53, %6 : vector<16x32xf32>
    %cst_54 = arith.constant 0.707106769 : f32
    %55 = vector.broadcast %cst_54 : f32 to vector<16x32xf32>
    %56 = arith.mulf %54, %55 : vector<16x32xf32>
    %c1_55 = arith.constant 1 : index
    %c1_56 = arith.constant 1 : index
    %c0_57 = arith.constant 0 : index
    %c0_58 = arith.constant 0 : index
    %57 = vector.load %arg4[%c1_55, %c1_56, %c0_57, %c0_58] : memref<3x3x32x32xf32, #tpu.memory_space<vmem>>, vector<1x1x32x32xf32>
    %58 = vector.shape_cast %57 : vector<1x1x32x32xf32> to vector<32x32xf32>
    %cst_59 = arith.constant dense<0.000000e+00> : vector<16x32xf32>
    %59 = tpu.matmul %56, %58, %cst_59 {dimension_numbers = #tpu.dot_dimension_numbers<[1], [0], [0], [1], [0, 0, 1, 1], [], []>} : vector<16x32xf32>, vector<32x32xf32>, vector<16x32xf32> -> vector<16x32xf32>
    %c1_60 = arith.constant 1 : index
    %c1_61 = arith.constant 1 : index
    %c0_62 = arith.constant 0 : index
    %c0_63 = arith.constant 0 : index
    %60 = vector.load %arg5[%c1_60, %c1_61, %c0_62, %c0_63] : memref<3x3x32x32xf32, #tpu.memory_space<vmem>>, vector<1x1x32x32xf32>
    %61 = vector.shape_cast %60 : vector<1x1x32x32xf32> to vector<32x32xf32>
    %cst_64 = arith.constant dense<0.000000e+00> : vector<16x32xf32>
    %62 = tpu.matmul %56, %61, %cst_64 {dimension_numbers = #tpu.dot_dimension_numbers<[1], [0], [0], [1], [0, 0, 1, 1], [], []>} : vector<16x32xf32>, vector<32x32xf32>, vector<16x32xf32> -> vector<16x32xf32>
    %63 = vector.shape_cast %56 : vector<16x32xf32> to vector<1x16x32xf32>
    %c0_65 = arith.constant 0 : index
    %c1_66 = arith.constant 1 : index
    %c0_67 = arith.constant 0 : index
    %64 = vector.load %arg11[%c0_65, %c1_66, %c0_67] : memref<1x18x32xf32, #tpu.memory_space<vmem>>, vector<1x16x32xf32>
    tpu.vector_store %arg11[%c0_65, %c1_66, %c0_67], %63 {strides = array<i32>} : memref<1x18x32xf32, #tpu.memory_space<vmem>>, vector<1x16x32xf32>,
    %c0_68 = arith.constant 0 : index
    %c0_69 = arith.constant 0 : index
    %c0_70 = arith.constant 0 : index
    %65 = vector.load %arg11[%c0_68, %c0_69, %c0_70] : memref<1x18x32xf32, #tpu.memory_space<vmem>>, vector<1x18x32xf32>
    %66 = vector.extract_strided_slice %65 {offsets = [0, 0, 0], sizes = [1, 16, 32], strides = [1, 1, 1]} : vector<1x18x32xf32> to vector<1x16x32xf32>
    %67 = vector.shape_cast %66 : vector<1x16x32xf32> to vector<16x32xf32>
    %c1_71 = arith.constant 1 : index
    %c0_72 = arith.constant 0 : index
    %c0_73 = arith.constant 0 : index
    %c0_74 = arith.constant 0 : index
    %68 = vector.load %arg4[%c1_71, %c0_72, %c0_73, %c0_74] : memref<3x3x32x32xf32, #tpu.memory_space<vmem>>, vector<1x1x32x32xf32>
    %69 = vector.shape_cast %68 : vector<1x1x32x32xf32> to vector<32x32xf32>
    %cst_75 = arith.constant dense<0.000000e+00> : vector<16x32xf32>
    %70 = tpu.matmul %67, %69, %cst_75 {dimension_numbers = #tpu.dot_dimension_numbers<[1], [0], [0], [1], [0, 0, 1, 1], [], []>} : vector<16x32xf32>, vector<32x32xf32>, vector<16x32xf32> -> vector<16x32xf32>
    %71 = arith.addf %59, %70 : vector<16x32xf32>
    %c1_76 = arith.constant 1 : index
    %c0_77 = arith.constant 0 : index
    %c0_78 = arith.constant 0 : index
    %c0_79 = arith.constant 0 : index
    %72 = vector.load %arg5[%c1_76, %c0_77, %c0_78, %c0_79] : memref<3x3x32x32xf32, #tpu.memory_space<vmem>>, vector<1x1x32x32xf32>
    %73 = vector.shape_cast %72 : vector<1x1x32x32xf32> to vector<32x32xf32>
    %cst_80 = arith.constant dense<0.000000e+00> : vector<16x32xf32>
    %74 = tpu.matmul %67, %73, %cst_80 {dimension_numbers = #tpu.dot_dimension_numbers<[1], [0], [0], [1], [0, 0, 1, 1], [], []>} : vector<16x32xf32>, vector<32x32xf32>, vector<16x32xf32> -> vector<16x32xf32>
    %75 = arith.addf %62, %74 : vector<16x32xf32>
    %76 = vector.extract_strided_slice %65 {offsets = [0, 2, 0], sizes = [1, 16, 32], strides = [1, 1, 1]} : vector<1x18x32xf32> to vector<1x16x32xf32>
    %77 = vector.shape_cast %76 : vector<1x16x32xf32> to vector<16x32xf32>
    %c1_81 = arith.constant 1 : index
    %c2_82 = arith.constant 2 : index
    %c0_83 = arith.constant 0 : index
    %c0_84 = arith.constant 0 : index
    %78 = vector.load %arg4[%c1_81, %c2_82, %c0_83, %c0_84] : memref<3x3x32x32xf32, #tpu.memory_space<vmem>>, vector<1x1x32x32xf32>
    %79 = vector.shape_cast %78 : vector<1x1x32x32xf32> to vector<32x32xf32>
    %cst_85 = arith.constant dense<0.000000e+00> : vector<16x32xf32>
    %80 = tpu.matmul %77, %79, %cst_85 {dimension_numbers = #tpu.dot_dimension_numbers<[1], [0], [0], [1], [0, 0, 1, 1], [], []>} : vector<16x32xf32>, vector<32x32xf32>, vector<16x32xf32> -> vector<16x32xf32>
    %81 = arith.addf %71, %80 : vector<16x32xf32>
    %c1_86 = arith.constant 1 : index
    %c2_87 = arith.constant 2 : index
    %c0_88 = arith.constant 0 : index
    %c0_89 = arith.constant 0 : index
    %82 = vector.load %arg5[%c1_86, %c2_87, %c0_88, %c0_89] : memref<3x3x32x32xf32, #tpu.memory_space<vmem>>, vector<1x1x32x32xf32>
    %83 = vector.shape_cast %82 : vector<1x1x32x32xf32> to vector<32x32xf32>
    %cst_90 = arith.constant dense<0.000000e+00> : vector<16x32xf32>
    %84 = tpu.matmul %77, %83, %cst_90 {dimension_numbers = #tpu.dot_dimension_numbers<[1], [0], [0], [1], [0, 0, 1, 1], [], []>} : vector<16x32xf32>, vector<32x32xf32>, vector<16x32xf32> -> vector<16x32xf32>
    %85 = arith.addf %75, %84 : vector<16x32xf32>
    %c1_91 = arith.constant 1 : index
    %c0_92 = arith.constant 0 : index
    %c0_93 = arith.constant 0 : index
    %86 = vector.load %arg6[%c1_91, %c0_92, %c0_93] : memref<3x1x32xf32, #tpu.memory_space<vmem>>, vector<1x1x32xf32>
    %87 = vector.shape_cast %86 : vector<1x1x32xf32> to vector<1x32xf32>
    %88 = vector.broadcast %87 : vector<1x32xf32> to vector<16x32xf32>
    %89 = arith.addf %81, %88 : vector<16x32xf32>
    %c1_94 = arith.constant 1 : index
    %c0_95 = arith.constant 0 : index
    %c0_96 = arith.constant 0 : index
    %90 = vector.load %arg7[%c1_94, %c0_95, %c0_96] : memref<3x1x32xf32, #tpu.memory_space<vmem>>, vector<1x1x32xf32>
    %91 = vector.shape_cast %90 : vector<1x1x32xf32> to vector<1x32xf32>
    %92 = vector.broadcast %91 : vector<1x32xf32> to vector<16x32xf32>
    %93 = arith.addf %85, %92 : vector<16x32xf32>
    %94 = arith.negf %93 : vector<16x32xf32>
    %95 = math.exp %94 : vector<16x32xf32>
    %cst_97 = arith.constant 1.000000e+00 : f32
    %96 = vector.broadcast %cst_97 : f32 to vector<16x32xf32>
    %97 = arith.addf %96, %95 : vector<16x32xf32>
    %98 = arith.divf %96, %97 : vector<16x32xf32>
    %99 = arith.mulf %89, %98 : vector<16x32xf32>
    %100 = arith.addf %99, %56 : vector<16x32xf32>
    %cst_98 = arith.constant 0.707106769 : f32
    %101 = vector.broadcast %cst_98 : f32 to vector<16x32xf32>
    %102 = arith.mulf %100, %101 : vector<16x32xf32>
    %c2_99 = arith.constant 2 : index
    %c1_100 = arith.constant 1 : index
    %c0_101 = arith.constant 0 : index
    %c0_102 = arith.constant 0 : index
    %103 = vector.load %arg4[%c2_99, %c1_100, %c0_101, %c0_102] : memref<3x3x32x32xf32, #tpu.memory_space<vmem>>, vector<1x1x32x32xf32>
    %104 = vector.shape_cast %103 : vector<1x1x32x32xf32> to vector<32x32xf32>
    %cst_103 = arith.constant dense<0.000000e+00> : vector<16x32xf32>
    %105 = tpu.matmul %102, %104, %cst_103 {dimension_numbers = #tpu.dot_dimension_numbers<[1], [0], [0], [1], [0, 0, 1, 1], [], []>} : vector<16x32xf32>, vector<32x32xf32>, vector<16x32xf32> -> vector<16x32xf32>
    %c2_104 = arith.constant 2 : index
    %c1_105 = arith.constant 1 : index
    %c0_106 = arith.constant 0 : index
    %c0_107 = arith.constant 0 : index
    %106 = vector.load %arg5[%c2_104, %c1_105, %c0_106, %c0_107] : memref<3x3x32x32xf32, #tpu.memory_space<vmem>>, vector<1x1x32x32xf32>
    %107 = vector.shape_cast %106 : vector<1x1x32x32xf32> to vector<32x32xf32>
    %cst_108 = arith.constant dense<0.000000e+00> : vector<16x32xf32>
    %108 = tpu.matmul %102, %107, %cst_108 {dimension_numbers = #tpu.dot_dimension_numbers<[1], [0], [0], [1], [0, 0, 1, 1], [], []>} : vector<16x32xf32>, vector<32x32xf32>, vector<16x32xf32> -> vector<16x32xf32>
    %109 = vector.shape_cast %102 : vector<16x32xf32> to vector<1x16x32xf32>
    %c0_109 = arith.constant 0 : index
    %c1_110 = arith.constant 1 : index
    %c0_111 = arith.constant 0 : index
    %110 = vector.load %arg11[%c0_109, %c1_110, %c0_111] : memref<1x18x32xf32, #tpu.memory_space<vmem>>, vector<1x16x32xf32>
    tpu.vector_store %arg11[%c0_109, %c1_110, %c0_111], %109 {strides = array<i32>} : memref<1x18x32xf32, #tpu.memory_space<vmem>>, vector<1x16x32xf32>,
    %c0_112 = arith.constant 0 : index
    %c0_113 = arith.constant 0 : index
    %c0_114 = arith.constant 0 : index
    %111 = vector.load %arg11[%c0_112, %c0_113, %c0_114] : memref<1x18x32xf32, #tpu.memory_space<vmem>>, vector<1x18x32xf32>
    %112 = vector.extract_strided_slice %111 {offsets = [0, 0, 0], sizes = [1, 16, 32], strides = [1, 1, 1]} : vector<1x18x32xf32> to vector<1x16x32xf32>
    %113 = vector.shape_cast %112 : vector<1x16x32xf32> to vector<16x32xf32>
    %c2_115 = arith.constant 2 : index
    %c0_116 = arith.constant 0 : index
    %c0_117 = arith.constant 0 : index
    %c0_118 = arith.constant 0 : index
    %114 = vector.load %arg4[%c2_115, %c0_116, %c0_117, %c0_118] : memref<3x3x32x32xf32, #tpu.memory_space<vmem>>, vector<1x1x32x32xf32>
    %115 = vector.shape_cast %114 : vector<1x1x32x32xf32> to vector<32x32xf32>
    %cst_119 = arith.constant dense<0.000000e+00> : vector<16x32xf32>
    %116 = tpu.matmul %113, %115, %cst_119 {dimension_numbers = #tpu.dot_dimension_numbers<[1], [0], [0], [1], [0, 0, 1, 1], [], []>} : vector<16x32xf32>, vector<32x32xf32>, vector<16x32xf32> -> vector<16x32xf32>
    %117 = arith.addf %105, %116 : vector<16x32xf32>
    %c2_120 = arith.constant 2 : index
    %c0_121 = arith.constant 0 : index
    %c0_122 = arith.constant 0 : index
    %c0_123 = arith.constant 0 : index
    %118 = vector.load %arg5[%c2_120, %c0_121, %c0_122, %c0_123] : memref<3x3x32x32xf32, #tpu.memory_space<vmem>>, vector<1x1x32x32xf32>
    %119 = vector.shape_cast %118 : vector<1x1x32x32xf32> to vector<32x32xf32>
    %cst_124 = arith.constant dense<0.000000e+00> : vector<16x32xf32>
    %120 = tpu.matmul %113, %119, %cst_124 {dimension_numbers = #tpu.dot_dimension_numbers<[1], [0], [0], [1], [0, 0, 1, 1], [], []>} : vector<16x32xf32>, vector<32x32xf32>, vector<16x32xf32> -> vector<16x32xf32>
    %121 = arith.addf %108, %120 : vector<16x32xf32>
    %122 = vector.extract_strided_slice %111 {offsets = [0, 2, 0], sizes = [1, 16, 32], strides = [1, 1, 1]} : vector<1x18x32xf32> to vector<1x16x32xf32>
    %123 = vector.shape_cast %122 : vector<1x16x32xf32> to vector<16x32xf32>
    %c2_125 = arith.constant 2 : index
    %c2_126 = arith.constant 2 : index
    %c0_127 = arith.constant 0 : index
    %c0_128 = arith.constant 0 : index
    %124 = vector.load %arg4[%c2_125, %c2_126, %c0_127, %c0_128] : memref<3x3x32x32xf32, #tpu.memory_space<vmem>>, vector<1x1x32x32xf32>
    %125 = vector.shape_cast %124 : vector<1x1x32x32xf32> to vector<32x32xf32>
    %cst_129 = arith.constant dense<0.000000e+00> : vector<16x32xf32>
    %126 = tpu.matmul %123, %125, %cst_129 {dimension_numbers = #tpu.dot_dimension_numbers<[1], [0], [0], [1], [0, 0, 1, 1], [], []>} : vector<16x32xf32>, vector<32x32xf32>, vector<16x32xf32> -> vector<16x32xf32>
    %127 = arith.addf %117, %126 : vector<16x32xf32>
    %c2_130 = arith.constant 2 : index
    %c2_131 = arith.constant 2 : index
    %c0_132 = arith.constant 0 : index
    %c0_133 = arith.constant 0 : index
    %128 = vector.load %arg5[%c2_130, %c2_131, %c0_132, %c0_133] : memref<3x3x32x32xf32, #tpu.memory_space<vmem>>, vector<1x1x32x32xf32>
    %129 = vector.shape_cast %128 : vector<1x1x32x32xf32> to vector<32x32xf32>
    %cst_134 = arith.constant dense<0.000000e+00> : vector<16x32xf32>
    %130 = tpu.matmul %123, %129, %cst_134 {dimension_numbers = #tpu.dot_dimension_numbers<[1], [0], [0], [1], [0, 0, 1, 1], [], []>} : vector<16x32xf32>, vector<32x32xf32>, vector<16x32xf32> -> vector<16x32xf32>
    %131 = arith.addf %121, %130 : vector<16x32xf32>
    %c2_135 = arith.constant 2 : index
    %c0_136 = arith.constant 0 : index
    %c0_137 = arith.constant 0 : index
    %132 = vector.load %arg6[%c2_135, %c0_136, %c0_137] : memref<3x1x32xf32, #tpu.memory_space<vmem>>, vector<1x1x32xf32>
    %133 = vector.shape_cast %132 : vector<1x1x32xf32> to vector<1x32xf32>
    %134 = vector.broadcast %133 : vector<1x32xf32> to vector<16x32xf32>
    %135 = arith.addf %127, %134 : vector<16x32xf32>
    %c2_138 = arith.constant 2 : index
    %c0_139 = arith.constant 0 : index
    %c0_140 = arith.constant 0 : index
    %136 = vector.load %arg7[%c2_138, %c0_139, %c0_140] : memref<3x1x32xf32, #tpu.memory_space<vmem>>, vector<1x1x32xf32>
    %137 = vector.shape_cast %136 : vector<1x1x32xf32> to vector<1x32xf32>
    %138 = vector.broadcast %137 : vector<1x32xf32> to vector<16x32xf32>
    %139 = arith.addf %131, %138 : vector<16x32xf32>
    %140 = arith.negf %139 : vector<16x32xf32>
    %141 = math.exp %140 : vector<16x32xf32>
    %cst_141 = arith.constant 1.000000e+00 : f32
    %142 = vector.broadcast %cst_141 : f32 to vector<16x32xf32>
    %143 = arith.addf %142, %141 : vector<16x32xf32>
    %144 = arith.divf %142, %143 : vector<16x32xf32>
    %145 = arith.mulf %135, %144 : vector<16x32xf32>
    %146 = arith.addf %145, %102 : vector<16x32xf32>
    %cst_142 = arith.constant 0.707106769 : f32
    %147 = vector.broadcast %cst_142 : f32 to vector<16x32xf32>
    %148 = arith.mulf %146, %147 : vector<16x32xf32>
    %cst_143 = arith.constant dense<0.000000e+00> : vector<16xf32>
    %149 = vector.multi_reduction <add>, %148, %cst_143 [1] : vector<16x32xf32> to vector<16xf32>
    %150 = vector.shape_cast %149 : vector<16xf32> to vector<16x1xf32>
    %151 = arith.mulf %148, %148 : vector<16x32xf32>
    %cst_144 = arith.constant dense<0.000000e+00> : vector<16xf32>
    %152 = vector.multi_reduction <add>, %151, %cst_144 [1] : vector<16x32xf32> to vector<16xf32>
    %153 = vector.shape_cast %152 : vector<16xf32> to vector<16x1xf32>
    %cst_145 = arith.constant 3.125000e-02 : f32
    %154 = vector.broadcast %cst_145 : f32 to vector<16x1xf32>
    %155 = arith.mulf %150, %154 : vector<16x1xf32>
    %cst_146 = arith.constant 3.125000e-02 : f32
    %156 = vector.broadcast %cst_146 : f32 to vector<16x1xf32>
    %157 = arith.mulf %153, %156 : vector<16x1xf32>
    %158 = arith.mulf %155, %155 : vector<16x1xf32>
    %159 = arith.subf %157, %158 : vector<16x1xf32>
    %cst_147 = arith.constant 0.000000e+00 : f32
    %160 = vector.broadcast %cst_147 : f32 to vector<16x1xf32>
    %161 = arith.maximumf %159, %160 : vector<16x1xf32>
    %162 = vector.broadcast %155 : vector<16x1xf32> to vector<16x32xf32>
    %163 = arith.subf %148, %162 : vector<16x32xf32>
    %cst_148 = arith.constant 9.99999974E-6 : f32
    %164 = vector.broadcast %cst_148 : f32 to vector<16x1xf32>
    %165 = arith.addf %161, %164 : vector<16x1xf32>
    %166 = math.rsqrt %165 : vector<16x1xf32>
    %167 = vector.broadcast %166 : vector<16x1xf32> to vector<16x32xf32>
    %168 = arith.mulf %163, %167 : vector<16x32xf32>
    %c0_149 = arith.constant 0 : index
    %c0_150 = arith.constant 0 : index
    %169 = vector.load %arg8[%c0_149, %c0_150] : memref<1x32xf32, #tpu.memory_space<vmem>>, vector<1x32xf32>
    %170 = vector.broadcast %169 : vector<1x32xf32> to vector<16x32xf32>
    %171 = arith.mulf %168, %170 : vector<16x32xf32>
    %c0_151 = arith.constant 0 : index
    %c0_152 = arith.constant 0 : index
    %172 = vector.load %arg9[%c0_151, %c0_152] : memref<1x32xf32, #tpu.memory_space<vmem>>, vector<1x32xf32>
    %173 = vector.broadcast %172 : vector<1x32xf32> to vector<16x32xf32>
    %174 = arith.addf %171, %173 : vector<16x32xf32>
    %175 = vector.shape_cast %174 : vector<16x32xf32> to vector<1x16x32xf32>
    %c0_153 = arith.constant 0 : index
    %c0_154 = arith.constant 0 : index
    %c0_155 = arith.constant 0 : index
    %176 = vector.load %arg10[%c0_153, %c0_154, %c0_155] : memref<1x16x32xf32, #tpu.memory_space<vmem>>, vector<1x16x32xf32>
    tpu.vector_store %arg10[%c0_153, %c0_154, %c0_155], %175 {strides = array<i32>} : memref<1x16x32xf32, #tpu.memory_space<vmem>>, vector<1x16x32xf32>,
    return
  }
  func.func @transform_0(%arg0: i32) -> (i32, i32, i32) {
    %c0_i32 = arith.constant 0 : i32
    %c0_i32_0 = arith.constant 0 : i32
    %c0_i32_1 = arith.constant 0 : i32
    return %arg0, %c0_i32, %c0_i32_0 : i32, i32, i32
  }
  func.func @transform_1(%arg0: i32) -> (i32, i32) {
    %c0_i32 = arith.constant 0 : i32
    %c0_i32_0 = arith.constant 0 : i32
    %c0_i32_1 = arith.constant 0 : i32
    return %c0_i32, %c0_i32_0 : i32, i32
  }
  func.func @transform_2(%arg0: i32) -> (i32, i32) {
    %c0_i32 = arith.constant 0 : i32
    %c0_i32_0 = arith.constant 0 : i32
    %c0_i32_1 = arith.constant 0 : i32
    return %c0_i32, %c0_i32_0 : i32, i32
  }
  func.func @transform_3(%arg0: i32) -> (i32, i32, i32, i32) {
    %c0_i32 = arith.constant 0 : i32
    %c0_i32_0 = arith.constant 0 : i32
    %c0_i32_1 = arith.constant 0 : i32
    %c0_i32_2 = arith.constant 0 : i32
    %c0_i32_3 = arith.constant 0 : i32
    return %c0_i32, %c0_i32_0, %c0_i32_1, %c0_i32_2 : i32, i32, i32, i32
  }
  func.func @transform_4(%arg0: i32) -> (i32, i32, i32, i32) {
    %c0_i32 = arith.constant 0 : i32
    %c0_i32_0 = arith.constant 0 : i32
    %c0_i32_1 = arith.constant 0 : i32
    %c0_i32_2 = arith.constant 0 : i32
    %c0_i32_3 = arith.constant 0 : i32
    return %c0_i32, %c0_i32_0, %c0_i32_1, %c0_i32_2 : i32, i32, i32, i32
  }
  func.func @transform_5(%arg0: i32) -> (i32, i32, i32) {
    %c0_i32 = arith.constant 0 : i32
    %c0_i32_0 = arith.constant 0 : i32
    %c0_i32_1 = arith.constant 0 : i32
    %c0_i32_2 = arith.constant 0 : i32
    return %c0_i32, %c0_i32_0, %c0_i32_1 : i32, i32, i32
  }
  func.func @transform_6(%arg0: i32) -> (i32, i32, i32) {
    %c0_i32 = arith.constant 0 : i32
    %c0_i32_0 = arith.constant 0 : i32
    %c0_i32_1 = arith.constant 0 : i32
    %c0_i32_2 = arith.constant 0 : i32
    return %c0_i32, %c0_i32_0, %c0_i32_1 : i32, i32, i32
  }
  func.func @transform_7(%arg0: i32) -> (i32, i32) {
    %c0_i32 = arith.constant 0 : i32
    %c0_i32_0 = arith.constant 0 : i32
    %c0_i32_1 = arith.constant 0 : i32
    return %c0_i32, %c0_i32_0 : i32, i32
  }
  func.func @transform_8(%arg0: i32) -> (i32, i32) {
    %c0_i32 = arith.constant 0 : i32
    %c0_i32_0 = arith.constant 0 : i32
    %c0_i32_1 = arith.constant 0 : i32
    return %c0_i32, %c0_i32_0 : i32, i32
  }
  func.func @transform_9(%arg0: i32) -> (i32, i32, i32) {
    %c0_i32 = arith.constant 0 : i32
    %c0_i32_0 = arith.constant 0 : i32
    %c0_i32_1 = arith.constant 0 : i32
    return %arg0, %c0_i32, %c0_i32_0 : i32, i32, i32
  }
}

</mosaic_0001>

<llo_original>
// kernel: tpu_custom_call.1
$region0: #{tpu_custom_call.1}
  #allocation0 [shape = 'u32[]', space=smem, size = 0x4, offset = 0x4, fixed_abs, tag = 'smem constant byte address 0x4 - core index']
  #allocation1 [shape = 'u32[144,128]{1,0:T(1,128)}', space=vmem, size = 0x12000, scoped, tag = 'internal scratch']
  #allocation2 [shape = 'f32[1,18,32]{2,1,0:T(8,128)}', space=vmem, size = 0x3000, scoped, tag = 'scratch operand']
  %s0 = inlined_call_operand.hbm [shape: f32[2,16,16], index: 0, kind: input, shape index: {}]
  %s1 = inlined_call_operand.hbm [shape: f32[16,32], index: 1, kind: input, shape index: {}]
  %s2 = inlined_call_operand.vmem [shape: f32[1,32], index: 2, kind: input, shape index: {}]
  %s3 = inlined_call_operand.hbm [shape: f32[3,3,32,32], index: 3, kind: input, shape index: {}]
  %s4 = inlined_call_operand.hbm [shape: f32[3,3,32,32], index: 4, kind: input, shape index: {}]
  %s5 = inlined_call_operand.vmem [shape: f32[3,1,32], index: 5, kind: input, shape index: {}]
  %s6 = inlined_call_operand.vmem [shape: f32[3,1,32], index: 6, kind: input, shape index: {}]
  %s7 = inlined_call_operand.vmem [shape: f32[1,32], index: 7, kind: input, shape index: {}]
  %s8 = inlined_call_operand.vmem [shape: f32[1,32], index: 8, kind: input, shape index: {}]
  %s9 = inlined_call_operand.hbm [shape: f32[2,16,32], index: 9, kind: output, shape index: {}]
  %s10 = sld [smem:[#allocation0]]
  $region85: #{tpu_custom_call.1} parent=0
    _
  %s12 = ssub.s32 1, %s10
  %s13 = scalar_select 0, %s12, %s10
  $region1: #{tpu_custom_call.1} parent=0
    #allocation3 [shape = 'u8[16384]{0}', space=vmem, size = 0x4000, scoped, tag = 'input window, operand 0']
    #allocation4 [shape = 's32[2]{0}', space=sflag, size = 0x8, scoped, tag = 'scoped memory for tpu_custom_call.1']
    #allocation5 [shape = 's32[2]{0}', space=sflag, size = 0x8, scoped, tag = 'scoped memory for tpu_custom_call.1']
    #allocation6 [shape = 'u8[8192]{0}', space=vmem, size = 0x2000, scoped, tag = 'input window, operand 1, single buffered']
    #allocation7 [shape = 's32[1]{0}', space=sflag, size = 0x4, scoped, tag = 'scoped memory for tpu_custom_call.1']
    #allocation8 [shape = 'u8[147456]{0}', space=vmem, size = 0x24000, scoped, tag = 'input window, operand 3, single buffered']
    #allocation9 [shape = 'u8[147456]{0}', space=vmem, size = 0x24000, scoped, tag = 'input window, operand 4, single buffered']
    #allocation10 [shape = 's32[1]{0}', space=sflag, size = 0x4, scoped, tag = 'scoped memory for tpu_custom_call.1']
    #allocation11 [shape = 'u8[16384]{0}', space=vmem, size = 0x4000, scoped, tag = 'output window, operand 0']
    %14 = vsyncpa [#allocation4], 0
    %s15 = scalar_lea.sflag [#allocation4], 1
    %16 = vsyncpa %s15, 0
    %17 = vsyncpa [#allocation7], 0
    %18 = vsyncpa [#allocation10], 0
    %19 = vsyncpa [#allocation5], 0
    %s20 = scalar_lea.sflag [#allocation5], 1
    %21 = vsyncpa %s20, 0
    loop: start=0, step=1, limit=4
    $region2: #{tpu_custom_call.1} parent=1 // loop_pre_header
      _
    $region3: #{tpu_custom_call.1} parent=1 // loop_header
      %s23 = sphi 0, %s27
      %p24 = scmp.ge.s32.totalorder %s23, 4
      %s33 = sphi 0, %s35
      %s36 = sphi 0, %s33
      %s37 = sphi 0, %s36
      %s53 = sphi 0, %s37
      %s57 = sphi 0, %s57
      %s59 = sphi 0, %s57
      %s60 = sphi 0, %s59
      %s74 = sphi 0, %s60
      %s78 = sphi 0, %s78
      %s80 = sphi 0, %s78
      %s81 = sphi 0, %s80
      %s95 = sphi 0, %s81
      %s99 = sphi 0, %s99
      %s101 = sphi 0, %s99
      %s102 = sphi 0, %s101
      %s116 = sphi 0, %s102
      %s120 = sphi 0, %s120
      %s122 = sphi 0, %s120
      %s123 = sphi 0, %s122
      %s137 = sphi 0, %s123
      %s141 = sphi 0, %s141
      %s143 = sphi 0, %s141
      %s144 = sphi 0, %s143
      %s158 = sphi 0, %s144
      %s162 = sphi 0, %s162
      %s164 = sphi 0, %s162
      %s165 = sphi 0, %s164
      %s179 = sphi 0, %s165
      %s183 = sphi 0, %s183
      %s185 = sphi 0, %s183
      %s186 = sphi 0, %s185
      %s200 = sphi 0, %s186
      %s204 = sphi 0, %s204
      %s206 = sphi 0, %s204
      %s207 = sphi 0, %s206
      %s221 = sphi 0, %s207
      %s227 = sphi 0, %s229
      %s230 = sphi 0, %s227
      %s231 = sphi 0, %s230
      %s247 = sphi 0, %s231
    $region4: #{tpu_custom_call.1} parent=1 // loop_header_branch
      %26 = sbr.rel (%p24) target = $region8
    $region5: #{tpu_custom_call.1} parent=1 // loop_body
      %s28 = ssub.s32 %s23, 1
      %s29 = ssub.s32 %s23, 2
      %s30 = sadd.s32 %s23, 1
      %s31 = ssub.s32 %s23, %s30
      %p32 = scmp.eq.s32.totalorder %s31, 0
      %s34 = sadd.s32 %s33, 1
      %s35 = scalar_select %p32, %s33, %s34
      %p38 = pneg %p32
      %p39 = scmp.eq.s32.totalorder %s23, 1
      %p40 = por %p38, %p39
      %p41 = scmp.ne.s32.totalorder %s33, %s36
      %p42 = scmp.eq.s32.totalorder %s23, 0
      %p43 = por %p41, %p42
      %p44 = scmp.ne.s32.totalorder %s33, %s36
      %p45 = scmp.eq.s32.totalorder %s28, 1
      %p46 = por %p44, %p45
      %p47 = scmp.ne.s32.totalorder %s36, %s37
      %p48 = scmp.eq.s32.totalorder %s28, 0
      %p49 = por %p47, %p48
      %p50 = scmp.ne.s32.totalorder %s36, %s37
      %p51 = scmp.eq.s32.totalorder %s29, 1
      %p52 = por %p50, %p51
      %p54 = scmp.ne.s32.totalorder %s37, %s53
      %p55 = scmp.eq.s32.totalorder %s29, 0
      %p56 = por %p54, %p55
      %s58 = sadd.s32 %s57, 1
      %p61 = scmp.eq.s32.totalorder %s23, 1
      %p62 = scmp.ne.s32.totalorder %s57, %s59
      %p63 = scmp.eq.s32.totalorder %s23, 0
      %p64 = por %p62, %p63
      %p65 = scmp.ne.s32.totalorder %s57, %s59
      %p66 = scmp.eq.s32.totalorder %s28, 1
      %p67 = por %p65, %p66
      %p68 = scmp.ne.s32.totalorder %s59, %s60
      %p69 = scmp.eq.s32.totalorder %s28, 0
      %p70 = por %p68, %p69
      %p71 = scmp.ne.s32.totalorder %s59, %s60
      %p72 = scmp.eq.s32.totalorder %s29, 1
      %p73 = por %p71, %p72
      %p75 = scmp.ne.s32.totalorder %s60, %s74
      %p76 = scmp.eq.s32.totalorder %s29, 0
      %p77 = por %p75, %p76
      %s79 = sadd.s32 %s78, 1
      %p82 = scmp.eq.s32.totalorder %s23, 1
      %p83 = scmp.ne.s32.totalorder %s78, %s80
      %p84 = scmp.eq.s32.totalorder %s23, 0
      %p85 = por %p83, %p84
      %p86 = scmp.ne.s32.totalorder %s78, %s80
      %p87 = scmp.eq.s32.totalorder %s28, 1
      %p88 = por %p86, %p87
      %p89 = scmp.ne.s32.totalorder %s80, %s81
      %p90 = scmp.eq.s32.totalorder %s28, 0
      %p91 = por %p89, %p90
      %p92 = scmp.ne.s32.totalorder %s80, %s81
      %p93 = scmp.eq.s32.totalorder %s29, 1
      %p94 = por %p92, %p93
      %p96 = scmp.ne.s32.totalorder %s81, %s95
      %p97 = scmp.eq.s32.totalorder %s29, 0
      %p98 = por %p96, %p97
      %s100 = sadd.s32 %s99, 1
      %p103 = scmp.eq.s32.totalorder %s23, 1
      %p104 = scmp.ne.s32.totalorder %s99, %s101
      %p105 = scmp.eq.s32.totalorder %s23, 0
      %p106 = por %p104, %p105
      %p107 = scmp.ne.s32.totalorder %s99, %s101
      %p108 = scmp.eq.s32.totalorder %s28, 1
      %p109 = por %p107, %p108
      %p110 = scmp.ne.s32.totalorder %s101, %s102
      %p111 = scmp.eq.s32.totalorder %s28, 0
      %p112 = por %p110, %p111
      %p113 = scmp.ne.s32.totalorder %s101, %s102
      %p114 = scmp.eq.s32.totalorder %s29, 1
      %p115 = por %p113, %p114
      %p117 = scmp.ne.s32.totalorder %s102, %s116
      %p118 = scmp.eq.s32.totalorder %s29, 0
      %p119 = por %p117, %p118
      %s121 = sadd.s32 %s120, 1
      %p124 = scmp.eq.s32.totalorder %s23, 1
      %p125 = scmp.ne.s32.totalorder %s120, %s122
      %p126 = scmp.eq.s32.totalorder %s23, 0
      %p127 = por %p125, %p126
      %p128 = scmp.ne.s32.totalorder %s120, %s122
      %p129 = scmp.eq.s32.totalorder %s28, 1
      %p130 = por %p128, %p129
      %p131 = scmp.ne.s32.totalorder %s122, %s123
      %p132 = scmp.eq.s32.totalorder %s28, 0
      %p133 = por %p131, %p132
      %p134 = scmp.ne.s32.totalorder %s122, %s123
      %p135 = scmp.eq.s32.totalorder %s29, 1
      %p136 = por %p134, %p135
      %p138 = scmp.ne.s32.totalorder %s123, %s137
      %p139 = scmp.eq.s32.totalorder %s29, 0
      %p140 = por %p138, %p139
      %s142 = sadd.s32 %s141, 1
      %p145 = scmp.eq.s32.totalorder %s23, 1
      %p146 = scmp.ne.s32.totalorder %s141, %s143
      %p147 = scmp.eq.s32.totalorder %s23, 0
      %p148 = por %p146, %p147
      %p149 = scmp.ne.s32.totalorder %s141, %s143
      %p150 = scmp.eq.s32.totalorder %s28, 1
      %p151 = por %p149, %p150
      %p152 = scmp.ne.s32.totalorder %s143, %s144
      %p153 = scmp.eq.s32.totalorder %s28, 0
      %p154 = por %p152, %p153
      %p155 = scmp.ne.s32.totalorder %s143, %s144
      %p156 = scmp.eq.s32.totalorder %s29, 1
      %p157 = por %p155, %p156
      %p159 = scmp.ne.s32.totalorder %s144, %s158
      %p160 = scmp.eq.s32.totalorder %s29, 0
      %p161 = por %p159, %p160
      %s163 = sadd.s32 %s162, 1
      %p166 = scmp.eq.s32.totalorder %s23, 1
      %p167 = scmp.ne.s32.totalorder %s162, %s164
      %p168 = scmp.eq.s32.totalorder %s23, 0
      %p169 = por %p167, %p168
      %p170 = scmp.ne.s32.totalorder %s162, %s164
      %p171 = scmp.eq.s32.totalorder %s28, 1
      %p172 = por %p170, %p171
      %p173 = scmp.ne.s32.totalorder %s164, %s165
      %p174 = scmp.eq.s32.totalorder %s28, 0
      %p175 = por %p173, %p174
      %p176 = scmp.ne.s32.totalorder %s164, %s165
      %p177 = scmp.eq.s32.totalorder %s29, 1
      %p178 = por %p176, %p177
      %p180 = scmp.ne.s32.totalorder %s165, %s179
      %p181 = scmp.eq.s32.totalorder %s29, 0
      %p182 = por %p180, %p181
      %s184 = sadd.s32 %s183, 1
      %p187 = scmp.eq.s32.totalorder %s23, 1
      %p188 = scmp.ne.s32.totalorder %s183, %s185
      %p189 = scmp.eq.s32.totalorder %s23, 0
      %p190 = por %p188, %p189
      %p191 = scmp.ne.s32.totalorder %s183, %s185
      %p192 = scmp.eq.s32.totalorder %s28, 1
      %p193 = por %p191, %p192
      %p194 = scmp.ne.s32.totalorder %s185, %s186
      %p195 = scmp.eq.s32.totalorder %s28, 0
      %p196 = por %p194, %p195
      %p197 = scmp.ne.s32.totalorder %s185, %s186
      %p198 = scmp.eq.s32.totalorder %s29, 1
      %p199 = por %p197, %p198
      %p201 = scmp.ne.s32.totalorder %s186, %s200
      %p202 = scmp.eq.s32.totalorder %s29, 0
      %p203 = por %p201, %p202
      %s205 = sadd.s32 %s204, 1
      %p208 = scmp.eq.s32.totalorder %s23, 1
      %p209 = scmp.ne.s32.totalorder %s204, %s206
      %p210 = scmp.eq.s32.totalorder %s23, 0
      %p211 = por %p209, %p210
      %p212 = scmp.ne.s32.totalorder %s204, %s206
      %p213 = scmp.eq.s32.totalorder %s28, 1
      %p214 = por %p212, %p213
      %p215 = scmp.ne.s32.totalorder %s206, %s207
      %p216 = scmp.eq.s32.totalorder %s28, 0
      %p217 = por %p215, %p216
      %p218 = scmp.ne.s32.totalorder %s206, %s207
      %p219 = scmp.eq.s32.totalorder %s29, 1
      %p220 = por %p218, %p219
      %p222 = scmp.ne.s32.totalorder %s207, %s221
      %p223 = scmp.eq.s32.totalorder %s29, 0
      %p224 = por %p222, %p223
      %s225 = ssub.s32 %s23, %s30
      %p226 = scmp.eq.s32.totalorder %s225, 0
      %s228 = sadd.s32 %s227, 1
      %s229 = scalar_select %p226, %s227, %s228
      %p232 = pneg %p226
      %p233 = scmp.eq.s32.totalorder %s23, 1
      %p234 = por %p232, %p233
      %p235 = scmp.ne.s32.totalorder %s227, %s230
      %p236 = scmp.eq.s32.totalorder %s23, 0
      %p237 = por %p235, %p236
      %p238 = scmp.ne.s32.totalorder %s227, %s230
      %p239 = scmp.eq.s32.totalorder %s28, 1
      %p240 = por %p238, %p239
      %p241 = scmp.ne.s32.totalorder %s230, %s231
      %p242 = scmp.eq.s32.totalorder %s28, 0
      %p243 = por %p241, %p242
      %p244 = scmp.ne.s32.totalorder %s230, %s231
      %p245 = scmp.eq.s32.totalorder %s29, 1
      %p246 = por %p244, %p245
      %p248 = scmp.ne.s32.totalorder %s231, %s247
      %p249 = scmp.eq.s32.totalorder %s29, 0
      %p250 = por %p248, %p249
      %p251 = scmp.le.s32.totalorder 1, %s23
      %p252 = scmp.lt.s32.totalorder %s23, 3
      %p253 = pnand %p251, %p252
      %p254 = pneg %p253
      // Predicated region
      $region9: #{tpu_custom_call.1} parent=5 // pred_check
        _
      $region10: #{tpu_custom_call.1} parent=5 // pred_check_branch
        %256 = sbr.rel (%p253) target = $region12
      $region11: #{tpu_custom_call.1} parent=5 // pred_region
        %s257 = ssub.s32 %s23, 1
        // Predicated region
        $region13: #{tpu_custom_call.1} parent=11 // pred_check
          %p258 = pneg %p70
        $region14: #{tpu_custom_call.1} parent=11 // pred_check_branch
          %260 = sbr.rel (%p258) target = $region16
        $region15: #{tpu_custom_call.1} parent=11 // pred_region
          %s262 = ssub.s32 256, 256
          %263 = vsyncadd [#allocation7], %s262
          %s264 = sshll.u32 [#allocation6], 4
          %s265 = int_to_ptr.vmem [resolvable:$true] %s264
          %270 = dma.hbm_to_vmem [thread:$0]  %s1, 256, %s265, [#allocation7], 128, 128, 8
        $region16: #{tpu_custom_call.1} parent=11 // pred_fallthru
          _
        // Predicated region
        $region17: #{tpu_custom_call.1} parent=11 // pred_check
          %p271 = pneg %p91
        $region18: #{tpu_custom_call.1} parent=11 // pred_check_branch
          %273 = sbr.rel (%p271) target = $region20
        $region19: #{tpu_custom_call.1} parent=11 // pred_region
          _
        $region20: #{tpu_custom_call.1} parent=11 // pred_fallthru
          _
        // Predicated region
        $region21: #{tpu_custom_call.1} parent=11 // pred_check
          %p274 = pneg %p112
        $region22: #{tpu_custom_call.1} parent=11 // pred_check_branch
          %276 = sbr.rel (%p274) target = $region24
        $region23: #{tpu_custom_call.1} parent=11 // pred_region
          %s278 = ssub.s32 4608, 4608
          %279 = vsyncadd [#allocation7], %s278
          %s280 = sshll.u32 [#allocation8], 4
          %s281 = int_to_ptr.vmem [resolvable:$true] %s280
          %286 = dma.hbm_to_vmem [thread:$0]  %s3, 4608, %s281, [#allocation7], 128, 128, 8
        $region24: #{tpu_custom_call.1} parent=11 // pred_fallthru
          _
        // Predicated region
        $region25: #{tpu_custom_call.1} parent=11 // pred_check
          %p287 = pneg %p133
        $region26: #{tpu_custom_call.1} parent=11 // pred_check_branch
          %289 = sbr.rel (%p287) target = $region28
        $region27: #{tpu_custom_call.1} parent=11 // pred_region
          %s291 = ssub.s32 4608, 4608
          %292 = vsyncadd [#allocation10], %s291
          %s293 = sshll.u32 [#allocation9], 4
          %s294 = int_to_ptr.vmem [resolvable:$true] %s293
          %299 = dma.hbm_to_vmem [thread:$0]  %s4, 4608, %s294, [#allocation10], 128, 128, 8
        $region28: #{tpu_custom_call.1} parent=11 // pred_fallthru
          _
        // Predicated region
        $region29: #{tpu_custom_call.1} parent=11 // pred_check
          %p300 = pneg %p154
        $region30: #{tpu_custom_call.1} parent=11 // pred_check_branch
          %302 = sbr.rel (%p300) target = $region32
        $region31: #{tpu_custom_call.1} parent=11 // pred_region
          _
        $region32: #{tpu_custom_call.1} parent=11 // pred_fallthru
          _
        // Predicated region
        $region33: #{tpu_custom_call.1} parent=11 // pred_check
          %p303 = pneg %p175
        $region34: #{tpu_custom_call.1} parent=11 // pred_check_branch
          %305 = sbr.rel (%p303) target = $region36
        $region35: #{tpu_custom_call.1} parent=11 // pred_region
          _
        $region36: #{tpu_custom_call.1} parent=11 // pred_fallthru
          _
        // Predicated region
        $region37: #{tpu_custom_call.1} parent=11 // pred_check
          %p306 = pneg %p196
        $region38: #{tpu_custom_call.1} parent=11 // pred_check_branch
          %308 = sbr.rel (%p306) target = $region40
        $region39: #{tpu_custom_call.1} parent=11 // pred_region
          _
        $region40: #{tpu_custom_call.1} parent=11 // pred_fallthru
          _
        // Predicated region
        $region41: #{tpu_custom_call.1} parent=11 // pred_check
          %p309 = pneg %p217
        $region42: #{tpu_custom_call.1} parent=11 // pred_check_branch
          %311 = sbr.rel (%p309) target = $region44
        $region43: #{tpu_custom_call.1} parent=11 // pred_region
          _
        $region44: #{tpu_custom_call.1} parent=11 // pred_fallthru
          _
      $region12: #{tpu_custom_call.1} parent=5 // pred_fallthru
        _
      %p312 = scmp.lt.s32.totalorder %s23, 2
      // Predicated region
      $region45: #{tpu_custom_call.1} parent=5 // pred_check
        %p313 = pneg %p312
      $region46: #{tpu_custom_call.1} parent=5 // pred_check_branch
        %315 = sbr.rel (%p313) target = $region48
      $region47: #{tpu_custom_call.1} parent=5 // pred_region
        // Predicated region
        $region49: #{tpu_custom_call.1} parent=47 // pred_check
          %p316 = pneg %p43
        $region50: #{tpu_custom_call.1} parent=47 // pred_check_branch
          %318 = sbr.rel (%p316) target = $region52
        $region51: #{tpu_custom_call.1} parent=47 // pred_region
          %s319 = sand.u32 %s33, 1
          %s320 = scalar_lea.sflag [#allocation4], %s319
          %s321 = sand.u32 %s33, 1
          %s322 = smul.addr %s321, 16
          %s323 = scalar_lea.vmem [#allocation3], %s322
          %s325 = ssub.s32 256, 256
          %326 = vsyncadd %s320, %s325
          %s327 = smul.addr %s23, 2
          %s328 = smul.addr %s327, 128
          %s329 = scalar_lea.hbm %s0, %s328
          %s330 = sshll.u32 %s323, 4
          %s331 = int_to_ptr.vmem [resolvable:$true] %s330
          %336 = dma.hbm_to_vmem [thread:$0]  %s329, 256, %s331, %s320, 128, 128, 8
        $region52: #{tpu_custom_call.1} parent=47 // pred_fallthru
          _
      $region48: #{tpu_custom_call.1} parent=5 // pred_fallthru
        _
      %p337 = scmp.le.s32.totalorder 1, %s23
      %p338 = scmp.lt.s32.totalorder %s23, 3
      %p339 = pnand %p337, %p338
      %p340 = pneg %p339
      // Predicated region
      $region53: #{tpu_custom_call.1} parent=5 // pred_check
        _
      $region54: #{tpu_custom_call.1} parent=5 // pred_check_branch
        %342 = sbr.rel (%p339) target = $region56
      $region55: #{tpu_custom_call.1} parent=5 // pred_region
        %s343 = ssub.s32 %s23, 1
        %s344 = sand.u32 %s36, 1
        %s345 = scalar_lea.sflag [#allocation4], %s344
        %s346 = sand.u32 %s36, 1
        %s347 = smul.addr %s346, 16
        %s348 = scalar_lea.vmem [#allocation3], %s347
        // Predicated region
        $region57: #{tpu_custom_call.1} parent=55 // pred_check
          %p349 = pneg %p49
        $region58: #{tpu_custom_call.1} parent=55 // pred_check_branch
          %351 = sbr.rel (%p349) target = $region60
        $region59: #{tpu_custom_call.1} parent=55 // pred_region
          %352 = dma.done %s345, 256
        $region60: #{tpu_custom_call.1} parent=55 // pred_fallthru
          _
        // Predicated region
        $region61: #{tpu_custom_call.1} parent=55 // pred_check
          %p353 = pneg %p70
        $region62: #{tpu_custom_call.1} parent=55 // pred_check_branch
          %355 = sbr.rel (%p353) target = $region64
        $region63: #{tpu_custom_call.1} parent=55 // pred_region
          %356 = dma.done [#allocation7], 256
        $region64: #{tpu_custom_call.1} parent=55 // pred_fallthru
          _
        // Predicated region
        $region65: #{tpu_custom_call.1} parent=55 // pred_check
          %p357 = pneg %p112
        $region66: #{tpu_custom_call.1} parent=55 // pred_check_branch
          %359 = sbr.rel (%p357) target = $region68
        $region67: #{tpu_custom_call.1} parent=55 // pred_region
          %360 = dma.done [#allocation7], 4608
        $region68: #{tpu_custom_call.1} parent=55 // pred_fallthru
          _
        // Predicated region
        $region69: #{tpu_custom_call.1} parent=55 // pred_check
          %p361 = pneg %p133
        $region70: #{tpu_custom_call.1} parent=55 // pred_check_branch
          %363 = sbr.rel (%p361) target = $region72
        $region71: #{tpu_custom_call.1} parent=55 // pred_region
          %364 = dma.done [#allocation10], 4608
        $region72: #{tpu_custom_call.1} parent=55 // pred_fallthru
          _
        %s365 = sand.u32 %s36, 1
        %s366 = scalar_lea.sflag [#allocation4], %s365
        %s367 = sand.u32 %s36, 1
        %s368 = smul.addr %s367, 16
        %s369 = scalar_lea.vmem [#allocation3], %s368
        %p370 = pneg %p49
        %p371 = pneg %p46
        %p372 = pneg %p70
        %p373 = pneg %p67
        %p374 = pneg %p91
        %p375 = pneg %p88
        %p376 = pneg %p112
        %p377 = pneg %p109
        %p378 = pneg %p133
        %p379 = pneg %p130
        %p380 = pneg %p154
        %p381 = pneg %p151
        %p382 = pneg %p175
        %p383 = pneg %p172
        %p384 = pneg %p196
        %p385 = pneg %p193
        %p386 = pneg %p217
        %p387 = pneg %p214
        %p388 = pneg %p243
        %p389 = pneg %p240
        %s390 = sand.u32 %s230, 1
        %s391 = scalar_lea.sflag [#allocation5], %s390
        %s392 = sand.u32 %s230, 1
        %s393 = smul.addr %s392, 16
        %s394 = scalar_lea.vmem [#allocation11], %s393
        %v395 = vld [vmem:[%s348] sm:$0xff]
        %v396 = vld [vmem:[%s348 + $0x8] sm:$0xff]
        %v397 = vld [vmem:[#allocation6] sm:$0xff]
        %v398 = vld [vmem:[#allocation6 + $0x8] sm:$0xff]
        %v399 = vld [vmem:[%s2] sm:$0x1]
        %v401 = vlaneseq
        %v402 = vshrl.u32 %v401, 7
        %v403 = vsub.s32 0, %v402
        %v404 = vrot.slane %v399, %v403
        %vm406 = vcmask 130048
        %v408 = vsel %vm406, %v395, 0
        %v411 = vsel %vm406, %v396, 0
        %413 = vmatprep.subr.mxu0 0.0
        %414 = vmatpush1.msra.mxu0 %v397
        %415 = vmatprep.subr.mxu0 0.0
        %416 = vmatpush1.msra.mxu0 %v398
        %417 = vmatprep.subr.mxu0 0.0
        %418 = vmatpush1.msra.mxu0 0.0
        %419 = vmatprep.subr.mxu0 0.0
        %420 = vmatpush1.msra.mxu0 0.0
        %421 = vmatprep.subr.mxu0 0.0
        %422 = vmatpush1.msra.mxu0 0.0
        %423 = vmatprep.subr.mxu0 0.0
        %424 = vmatpush1.msra.mxu0 0.0
        %425 = vmatprep.subr.mxu0 0.0
        %426 = vmatpush1.msra.mxu0 0.0
        %427 = vmatprep.subr.mxu0 0.0
        %428 = vmatpush1.msra.mxu0 0.0
        %429 = vmatprep.subr.mxu0 0.0
        %430 = vmatpush1.msra.mxu0 0.0
        %431 = vmatprep.subr.mxu0 0.0
        %432 = vmatpush1.msra.mxu0 0.0
        %433 = vmatprep.subr.mxu0 0.0
        %434 = vmatpush1.msra.mxu0 0.0
        %435 = vmatprep.subr.mxu0 0.0
        %436 = vmatpush1.msra.mxu0 0.0
        %437 = vmatprep.subr.mxu0 0.0
        %438 = vmatpush1.msra.mxu0 0.0
        %439 = vmatprep.subr.mxu0 0.0
        %440 = vmatpush1.msra.mxu0 0.0
        %441 = vmatprep.subr.mxu0 0.0
        %442 = vmatpush1.msra.mxu0 0.0
        %443 = vmatprep.subr.mxu0 0.0
        %444 = vmatpush1.msra.mxu0 0.0
        %445 = vmatprep.subr.mxu0 0.0
        %446 = vmatpush1.msra.mxu0 0.0
        %447 = vmatprep.subr.mxu0 0.0
        %448 = vmatpush1.msra.mxu0 0.0
        %449 = vmatprep.subr.mxu0 0.0
        %450 = vmatpush1.msra.mxu0 0.0
        %451 = vmatprep.subr.mxu0 0.0
        %452 = vmatpush1.msra.mxu0 0.0
        %453 = vmatprep.subr.mxu0 0.0
        %454 = vmatpush1.msra.mxu0 0.0
        %455 = vmatprep.subr.mxu0 0.0
        %456 = vmatpush1.msra.mxu0 0.0
        %457 = vmatprep.subr.mxu0 0.0
        %458 = vmatpush1.msra.mxu0 0.0
        %459 = vmatprep.subr.mxu0 0.0
        %460 = vmatpush1.msra.mxu0 0.0
        %461 = vmatprep.subr.mxu0 0.0
        %462 = vmatpush1.msra.mxu0 0.0
        %463 = vmatprep.subr.mxu0 0.0
        %464 = vmatpush1.msra.mxu0 0.0
        %465 = vmatprep.subr.mxu0 0.0
        %466 = vmatpush1.msra.mxu0 0.0
        %467 = vmatprep.subr.mxu0 0.0
        %468 = vmatpush1.msra.mxu0 0.0
        %469 = vmatprep.subr.mxu0 0.0
        %470 = vmatpush1.msra.mxu0 0.0
        %471 = vmatprep.subr.mxu0 0.0
        %472 = vmatpush1.msra.mxu0 0.0
        %473 = vmatprep.subr.mxu0 0.0
        %474 = vmatpush1.msra.mxu0 0.0
        %475 = vmatprep.subr.mxu0 0.0
        %476 = vmatpush1.msra.mxu0 0.0
        %477 = vmatprep.mubr.f32.mxu0 0.0
        %478 = vmatmul.mubr.f32.gmra.mrb[0].mxu0 %v408
        %v479 = vpop.f32.mrb[0].mxu0
        %v480 = vadd.f32 %v404, %v479
        %v481 = vpop.f32.mrb[0].mxu0
        %482 = vmatprep.mubr.f32.mxu0 0.0
        %483 = vmatmul.mubr.f32.gmra.mrb[0].mxu0 %v411
        %v484 = vpop.f32.mrb[0].mxu0
        %v485 = vadd.f32 %v404, %v484
        %v486 = vpop.f32.mrb[0].mxu0
        %487 = vdwg.mxu0
        %vm488 = vcmask 253952
        %489 = vst.msk [vmem:[#allocation2] sm:$0x1] %vm488, 0.0
        %490 = vst.msk [vmem:[#allocation2 + $0x11] sm:$0x1] %vm488, 0.0
        %s491 = scalar_lea.vmem [#allocation8], 32
        %v492 = vld [vmem:[%s491] sm:$0xff]
        %v493 = vld [vmem:[%s491 + $0x8] sm:$0xff]
        %v494 = vld [vmem:[%s491 + $0x10] sm:$0xff]
        %v495 = vld [vmem:[%s491 + $0x18] sm:$0xff]
        %s496 = scalar_lea.vmem [#allocation9], 32
        %v497 = vld [vmem:[%s496] sm:$0xff]
        %v498 = vld [vmem:[%s496 + $0x8] sm:$0xff]
        %v499 = vld [vmem:[%s496 + $0x10] sm:$0xff]
        %v500 = vld [vmem:[%s496 + $0x18] sm:$0xff]
        %vm501 = vcmask 261120
        %502 = vst.msk [vmem:[#allocation2 + $0x1] sm:$0xff] %vm501, %v480
        %503 = vst.msk [vmem:[#allocation2 + $0x9] sm:$0xff] %vm501, %v485
        %v504 = vld [vmem:[#allocation2] sm:$0xff]
        %v505 = vld [vmem:[#allocation2 + $0x8] sm:$0xff]
        %v506 = vld [vmem:[#allocation2 + $0x10] sm:$0x3]
        %v507 = vld [vmem:[#allocation8] sm:$0xff]
        %v508 = vld [vmem:[#allocation8 + $0x8] sm:$0xff]
        %v509 = vld [vmem:[#allocation8 + $0x10] sm:$0xff]
        %v510 = vld [vmem:[#allocation8 + $0x18] sm:$0xff]
        %v512 = vsel %vm501, %v504, 0
        %v515 = vsel %vm501, %v505, 0
        %517 = vmatprep.subr.mxu0 0.0
        %518 = vmatpush1.msra.mxu0 %v507
        %519 = vmatprep.subr.mxu0 0.0
        %520 = vmatpush1.msra.mxu0 %v508
        %521 = vmatprep.subr.mxu0 0.0
        %522 = vmatpush1.msra.mxu0 %v509
        %523 = vmatprep.subr.mxu0 0.0
        %524 = vmatpush1.msra.mxu0 %v510
        %525 = vmatprep.subr.mxu0 0.0
        %526 = vmatpush1.msra.mxu0 0.0
        %527 = vmatprep.subr.mxu0 0.0
        %528 = vmatpush1.msra.mxu0 0.0
        %529 = vmatprep.subr.mxu0 0.0
        %530 = vmatpush1.msra.mxu0 0.0
        %531 = vmatprep.subr.mxu0 0.0
        %532 = vmatpush1.msra.mxu0 0.0
        %533 = vmatprep.subr.mxu0 0.0
        %534 = vmatpush1.msra.mxu0 0.0
        %535 = vmatprep.subr.mxu0 0.0
        %536 = vmatpush1.msra.mxu0 0.0
        %537 = vmatprep.subr.mxu0 0.0
        %538 = vmatpush1.msra.mxu0 0.0
        %539 = vmatprep.subr.mxu0 0.0
        %540 = vmatpush1.msra.mxu0 0.0
        %541 = vmatprep.subr.mxu0 0.0
        %542 = vmatpush1.msra.mxu0 0.0
        %543 = vmatprep.subr.mxu0 0.0
        %544 = vmatpush1.msra.mxu0 0.0
        %545 = vmatprep.subr.mxu0 0.0
        %546 = vmatpush1.msra.mxu0 0.0
        %547 = vmatprep.subr.mxu0 0.0
        %548 = vmatpush1.msra.mxu0 0.0
        %549 = vmatprep.subr.mxu0 0.0
        %550 = vmatpush1.msra.mxu0 0.0
        %551 = vmatprep.subr.mxu0 0.0
        %552 = vmatpush1.msra.mxu0 0.0
        %553 = vmatprep.subr.mxu0 0.0
        %554 = vmatpush1.msra.mxu0 0.0
        %555 = vmatprep.subr.mxu0 0.0
        %556 = vmatpush1.msra.mxu0 0.0
        %557 = vmatprep.subr.mxu0 0.0
        %558 = vmatpush1.msra.mxu0 0.0
        %559 = vmatprep.subr.mxu0 0.0
        %560 = vmatpush1.msra.mxu0 0.0
        %561 = vmatprep.subr.mxu0 0.0
        %562 = vmatpush1.msra.mxu0 0.0
        %563 = vmatprep.subr.mxu0 0.0
        %564 = vmatpush1.msra.mxu0 0.0
        %565 = vmatprep.subr.mxu0 0.0
        %566 = vmatpush1.msra.mxu0 0.0
        %567 = vmatprep.subr.mxu0 0.0
        %568 = vmatpush1.msra.mxu0 0.0
        %569 = vmatprep.subr.mxu0 0.0
        %570 = vmatpush1.msra.mxu0 0.0
        %571 = vmatprep.subr.mxu0 0.0
        %572 = vmatpush1.msra.mxu0 0.0
        %573 = vmatprep.subr.mxu0 0.0
        %574 = vmatpush1.msra.mxu0 0.0
        %575 = vmatprep.subr.mxu0 0.0
        %576 = vmatpush1.msra.mxu0 0.0
        %577 = vmatprep.subr.mxu0 0.0
        %578 = vmatpush1.msra.mxu0 0.0
        %579 = vmatprep.subr.mxu0 0.0
        %580 = vmatpush1.msra.mxu0 0.0
        %581 = vmatprep.mubr.f32.mxu0 0.0
        %582 = vmatmul.mubr.f32.gmra.mrb[0].mxu0 %v512
        %v583 = vpop.f32.mrb[0].mxu0
        %v584 = vadd.f32 0.0, %v583
        %v585 = vpop.f32.mrb[0].mxu0
        %586 = vmatprep.mubr.f32.mxu0 0.0
        %587 = vmatmul.mubr.f32.gmra.mrb[0].mxu0 %v515
        %v588 = vpop.f32.mrb[0].mxu0
        %v589 = vadd.f32 0.0, %v588
        %v590 = vpop.f32.mrb[0].mxu0
        %591 = vdwg.mxu0
        %v593 = vsel %vm501, %v480, 0
        %v596 = vsel %vm501, %v485, 0
        %598 = vmatprep.subr.mxu0 0.0
        %599 = vmatpush1.msra.mxu0 %v492
        %600 = vmatprep.subr.mxu0 0.0
        %601 = vmatpush1.msra.mxu0 %v493
        %602 = vmatprep.subr.mxu0 0.0
        %603 = vmatpush1.msra.mxu0 %v494
        %604 = vmatprep.subr.mxu0 0.0
        %605 = vmatpush1.msra.mxu0 %v495
        %606 = vmatprep.subr.mxu0 0.0
        %607 = vmatpush1.msra.mxu0 0.0
        %608 = vmatprep.subr.mxu0 0.0
        %609 = vmatpush1.msra.mxu0 0.0
        %610 = vmatprep.subr.mxu0 0.0
        %611 = vmatpush1.msra.mxu0 0.0
        %612 = vmatprep.subr.mxu0 0.0
        %613 = vmatpush1.msra.mxu0 0.0
        %614 = vmatprep.subr.mxu0 0.0
        %615 = vmatpush1.msra.mxu0 0.0
        %616 = vmatprep.subr.mxu0 0.0
        %617 = vmatpush1.msra.mxu0 0.0
        %618 = vmatprep.subr.mxu0 0.0
        %619 = vmatpush1.msra.mxu0 0.0
        %620 = vmatprep.subr.mxu0 0.0
        %621 = vmatpush1.msra.mxu0 0.0
        %622 = vmatprep.subr.mxu0 0.0
        %623 = vmatpush1.msra.mxu0 0.0
        %624 = vmatprep.subr.mxu0 0.0
        %625 = vmatpush1.msra.mxu0 0.0
        %626 = vmatprep.subr.mxu0 0.0
        %627 = vmatpush1.msra.mxu0 0.0
        %628 = vmatprep.subr.mxu0 0.0
        %629 = vmatpush1.msra.mxu0 0.0
        %630 = vmatprep.subr.mxu0 0.0
        %631 = vmatpush1.msra.mxu0 0.0
        %632 = vmatprep.subr.mxu0 0.0
        %633 = vmatpush1.msra.mxu0 0.0
        %634 = vmatprep.subr.mxu0 0.0
        %635 = vmatpush1.msra.mxu0 0.0
        %636 = vmatprep.subr.mxu0 0.0
        %637 = vmatpush1.msra.mxu0 0.0
        %638 = vmatprep.subr.mxu0 0.0
        %639 = vmatpush1.msra.mxu0 0.0
        %640 = vmatprep.subr.mxu0 0.0
        %641 = vmatpush1.msra.mxu0 0.0
        %642 = vmatprep.subr.mxu0 0.0
        %643 = vmatpush1.msra.mxu0 0.0
        %644 = vmatprep.subr.mxu0 0.0
        %645 = vmatpush1.msra.mxu0 0.0
        %646 = vmatprep.subr.mxu0 0.0
        %647 = vmatpush1.msra.mxu0 0.0
        %648 = vmatprep.subr.mxu0 0.0
        %649 = vmatpush1.msra.mxu0 0.0
        %650 = vmatprep.subr.mxu0 0.0
        %651 = vmatpush1.msra.mxu0 0.0
        %652 = vmatprep.subr.mxu0 0.0
        %653 = vmatpush1.msra.mxu0 0.0
        %654 = vmatprep.subr.mxu0 0.0
        %655 = vmatpush1.msra.mxu0 0.0
        %656 = vmatprep.subr.mxu0 0.0
        %657 = vmatpush1.msra.mxu0 0.0
        %658 = vmatprep.subr.mxu0 0.0
        %659 = vmatpush1.msra.mxu0 0.0
        %660 = vmatprep.subr.mxu0 0.0
        %661 = vmatpush1.msra.mxu0 0.0
        %662 = vmatprep.mubr.f32.mxu0 0.0
        %663 = vmatmul.mubr.f32.gmra.mrb[0].mxu0 %v593
        %v664 = vpop.f32.mrb[0].mxu0
        %v665 = vadd.f32 %v584, %v664
        %v666 = vpop.f32.mrb[0].mxu0
        %667 = vmatprep.mubr.f32.mxu0 0.0
        %668 = vmatmul.mubr.f32.gmra.mrb[0].mxu0 %v596
        %v669 = vpop.f32.mrb[0].mxu0
        %v670 = vadd.f32 %v589, %v669
        %v671 = vpop.f32.mrb[0].mxu0
        %672 = vdwg.mxu0
        %v673 = vld [vmem:[#allocation9] sm:$0xff]
        %v674 = vld [vmem:[#allocation9 + $0x8] sm:$0xff]
        %v675 = vld [vmem:[#allocation9 + $0x10] sm:$0xff]
        %v676 = vld [vmem:[#allocation9 + $0x18] sm:$0xff]
        %677 = vmatprep.subr.mxu0 0.0
        %678 = vmatpush1.msra.mxu0 %v673
        %679 = vmatprep.subr.mxu0 0.0
        %680 = vmatpush1.msra.mxu0 %v674
        %681 = vmatprep.subr.mxu0 0.0
        %682 = vmatpush1.msra.mxu0 %v675
        %683 = vmatprep.subr.mxu0 0.0
        %684 = vmatpush1.msra.mxu0 %v676
        %685 = vmatprep.subr.mxu0 0.0
        %686 = vmatpush1.msra.mxu0 0.0
        %687 = vmatprep.subr.mxu0 0.0
        %688 = vmatpush1.msra.mxu0 0.0
        %689 = vmatprep.subr.mxu0 0.0
        %690 = vmatpush1.msra.mxu0 0.0
        %691 = vmatprep.subr.mxu0 0.0
        %692 = vmatpush1.msra.mxu0 0.0
        %693 = vmatprep.subr.mxu0 0.0
        %694 = vmatpush1.msra.mxu0 0.0
        %695 = vmatprep.subr.mxu0 0.0
        %696 = vmatpush1.msra.mxu0 0.0
        %697 = vmatprep.subr.mxu0 0.0
        %698 = vmatpush1.msra.mxu0 0.0
        %699 = vmatprep.subr.mxu0 0.0
        %700 = vmatpush1.msra.mxu0 0.0
        %701 = vmatprep.subr.mxu0 0.0
        %702 = vmatpush1.msra.mxu0 0.0
        %703 = vmatprep.subr.mxu0 0.0
        %704 = vmatpush1.msra.mxu0 0.0
        %705 = vmatprep.subr.mxu0 0.0
        %706 = vmatpush1.msra.mxu0 0.0
        %707 = vmatprep.subr.mxu0 0.0
        %708 = vmatpush1.msra.mxu0 0.0
        %709 = vmatprep.subr.mxu0 0.0
        %710 = vmatpush1.msra.mxu0 0.0
        %711 = vmatprep.subr.mxu0 0.0
        %712 = vmatpush1.msra.mxu0 0.0
        %713 = vmatprep.subr.mxu0 0.0
        %714 = vmatpush1.msra.mxu0 0.0
        %715 = vmatprep.subr.mxu0 0.0
        %716 = vmatpush1.msra.mxu0 0.0
        %717 = vmatprep.subr.mxu0 0.0
        %718 = vmatpush1.msra.mxu0 0.0
        %719 = vmatprep.subr.mxu0 0.0
        %720 = vmatpush1.msra.mxu0 0.0
        %721 = vmatprep.subr.mxu0 0.0
        %722 = vmatpush1.msra.mxu0 0.0
        %723 = vmatprep.subr.mxu0 0.0
        %724 = vmatpush1.msra.mxu0 0.0
        %725 = vmatprep.subr.mxu0 0.0
        %726 = vmatpush1.msra.mxu0 0.0
        %727 = vmatprep.subr.mxu0 0.0
        %728 = vmatpush1.msra.mxu0 0.0
        %729 = vmatprep.subr.mxu0 0.0
        %730 = vmatpush1.msra.mxu0 0.0
        %731 = vmatprep.subr.mxu0 0.0
        %732 = vmatpush1.msra.mxu0 0.0
        %733 = vmatprep.subr.mxu0 0.0
        %734 = vmatpush1.msra.mxu0 0.0
        %735 = vmatprep.subr.mxu0 0.0
        %736 = vmatpush1.msra.mxu0 0.0
        %737 = vmatprep.subr.mxu0 0.0
        %738 = vmatpush1.msra.mxu0 0.0
        %739 = vmatprep.subr.mxu0 0.0
        %740 = vmatpush1.msra.mxu0 0.0
        %741 = vmatprep.mubr.f32.mxu0 0.0
        %742 = vmatmul.mubr.f32.gmra.mrb[0].mxu0 %v512
        %v743 = vpop.f32.mrb[0].mxu0
        %v744 = vadd.f32 0.0, %v743
        %v745 = vpop.f32.mrb[0].mxu0
        %746 = vmatprep.mubr.f32.mxu0 0.0
        %747 = vmatmul.mubr.f32.gmra.mrb[0].mxu0 %v515
        %v748 = vpop.f32.mrb[0].mxu0
        %v749 = vadd.f32 0.0, %v748
        %v750 = vpop.f32.mrb[0].mxu0
        %751 = vdwg.mxu0
        %752 = vmatprep.subr.mxu0 0.0
        %753 = vmatpush1.msra.mxu0 %v497
        %754 = vmatprep.subr.mxu0 0.0
        %755 = vmatpush1.msra.mxu0 %v498
        %756 = vmatprep.subr.mxu0 0.0
        %757 = vmatpush1.msra.mxu0 %v499
        %758 = vmatprep.subr.mxu0 0.0
        %759 = vmatpush1.msra.mxu0 %v500
        %760 = vmatprep.subr.mxu0 0.0
        %761 = vmatpush1.msra.mxu0 0.0
        %762 = vmatprep.subr.mxu0 0.0
        %763 = vmatpush1.msra.mxu0 0.0
        %764 = vmatprep.subr.mxu0 0.0
        %765 = vmatpush1.msra.mxu0 0.0
        %766 = vmatprep.subr.mxu0 0.0
        %767 = vmatpush1.msra.mxu0 0.0
        %768 = vmatprep.subr.mxu0 0.0
        %769 = vmatpush1.msra.mxu0 0.0
        %770 = vmatprep.subr.mxu0 0.0
        %771 = vmatpush1.msra.mxu0 0.0
        %772 = vmatprep.subr.mxu0 0.0
        %773 = vmatpush1.msra.mxu0 0.0
        %774 = vmatprep.subr.mxu0 0.0
        %775 = vmatpush1.msra.mxu0 0.0
        %776 = vmatprep.subr.mxu0 0.0
        %777 = vmatpush1.msra.mxu0 0.0
        %778 = vmatprep.subr.mxu0 0.0
        %779 = vmatpush1.msra.mxu0 0.0
        %780 = vmatprep.subr.mxu0 0.0
        %781 = vmatpush1.msra.mxu0 0.0
        %782 = vmatprep.subr.mxu0 0.0
        %783 = vmatpush1.msra.mxu0 0.0
        %784 = vmatprep.subr.mxu0 0.0
        %785 = vmatpush1.msra.mxu0 0.0
        %786 = vmatprep.subr.mxu0 0.0
        %787 = vmatpush1.msra.mxu0 0.0
        %788 = vmatprep.subr.mxu0 0.0
        %789 = vmatpush1.msra.mxu0 0.0
        %790 = vmatprep.subr.mxu0 0.0
        %791 = vmatpush1.msra.mxu0 0.0
        %792 = vmatprep.subr.mxu0 0.0
        %793 = vmatpush1.msra.mxu0 0.0
        %794 = vmatprep.subr.mxu0 0.0
        %795 = vmatpush1.msra.mxu0 0.0
        %796 = vmatprep.subr.mxu0 0.0
        %797 = vmatpush1.msra.mxu0 0.0
        %798 = vmatprep.subr.mxu0 0.0
        %799 = vmatpush1.msra.mxu0 0.0
        %800 = vmatprep.subr.mxu0 0.0
        %801 = vmatpush1.msra.mxu0 0.0
        %802 = vmatprep.subr.mxu0 0.0
        %803 = vmatpush1.msra.mxu0 0.0
        %804 = vmatprep.subr.mxu0 0.0
        %805 = vmatpush1.msra.mxu0 0.0
        %806 = vmatprep.subr.mxu0 0.0
        %807 = vmatpush1.msra.mxu0 0.0
        %808 = vmatprep.subr.mxu0 0.0
        %809 = vmatpush1.msra.mxu0 0.0
        %810 = vmatprep.subr.mxu0 0.0
        %811 = vmatpush1.msra.mxu0 0.0
        %812 = vmatprep.subr.mxu0 0.0
        %813 = vmatpush1.msra.mxu0 0.0
        %814 = vmatprep.subr.mxu0 0.0
        %815 = vmatpush1.msra.mxu0 0.0
        %816 = vmatprep.mubr.f32.mxu0 0.0
        %817 = vmatmul.mubr.f32.gmra.mrb[0].mxu0 %v593
        %v818 = vpop.f32.mrb[0].mxu0
        %v819 = vadd.f32 %v744, %v818
        %v820 = vpop.f32.mrb[0].mxu0
        %821 = vmatprep.mubr.f32.mxu0 0.0
        %822 = vmatmul.mubr.f32.gmra.mrb[0].mxu0 %v596
        %v823 = vpop.f32.mrb[0].mxu0
        %v824 = vadd.f32 %v749, %v823
        %v825 = vpop.f32.mrb[0].mxu0
        %826 = vdwg.mxu0
        %s827 = scalar_lea.vmem [#allocation8], 64
        %v828 = vld [vmem:[%s827] sm:$0xff]
        %v829 = vld [vmem:[%s827 + $0x8] sm:$0xff]
        %v830 = vld [vmem:[%s827 + $0x10] sm:$0xff]
        %v831 = vld [vmem:[%s827 + $0x18] sm:$0xff]
        %vm833 = vcmask 1045504
        %v834 = vrot.slane %v504, 2
        %v835 = vrot.slane %v505, 2
        %v836 = vsel %vm833, %v834, %v835
        %v837 = vrot.slane %v506, 2
        %v838 = vsel %vm833, %v835, %v837
        %v839 = vsel %vm501, %v836, 0
        %v841 = vsel %vm501, %v838, 0
        %843 = vmatprep.subr.mxu0 0.0
        %844 = vmatpush1.msra.mxu0 %v828
        %845 = vmatprep.subr.mxu0 0.0
        %846 = vmatpush1.msra.mxu0 %v829
        %847 = vmatprep.subr.mxu0 0.0
        %848 = vmatpush1.msra.mxu0 %v830
        %849 = vmatprep.subr.mxu0 0.0
        %850 = vmatpush1.msra.mxu0 %v831
        %851 = vmatprep.subr.mxu0 0.0
        %852 = vmatpush1.msra.mxu0 0.0
        %853 = vmatprep.subr.mxu0 0.0
        %854 = vmatpush1.msra.mxu0 0.0
        %855 = vmatprep.subr.mxu0 0.0
        %856 = vmatpush1.msra.mxu0 0.0
        %857 = vmatprep.subr.mxu0 0.0
        %858 = vmatpush1.msra.mxu0 0.0
        %859 = vmatprep.subr.mxu0 0.0
        %860 = vmatpush1.msra.mxu0 0.0
        %861 = vmatprep.subr.mxu0 0.0
        %862 = vmatpush1.msra.mxu0 0.0
        %863 = vmatprep.subr.mxu0 0.0
        %864 = vmatpush1.msra.mxu0 0.0
        %865 = vmatprep.subr.mxu0 0.0
        %866 = vmatpush1.msra.mxu0 0.0
        %867 = vmatprep.subr.mxu0 0.0
        %868 = vmatpush1.msra.mxu0 0.0
        %869 = vmatprep.subr.mxu0 0.0
        %870 = vmatpush1.msra.mxu0 0.0
        %871 = vmatprep.subr.mxu0 0.0
        %872 = vmatpush1.msra.mxu0 0.0
        %873 = vmatprep.subr.mxu0 0.0
        %874 = vmatpush1.msra.mxu0 0.0
        %875 = vmatprep.subr.mxu0 0.0
        %876 = vmatpush1.msra.mxu0 0.0
        %877 = vmatprep.subr.mxu0 0.0
        %878 = vmatpush1.msra.mxu0 0.0
        %879 = vmatprep.subr.mxu0 0.0
        %880 = vmatpush1.msra.mxu0 0.0
        %881 = vmatprep.subr.mxu0 0.0
        %882 = vmatpush1.msra.mxu0 0.0
        %883 = vmatprep.subr.mxu0 0.0
        %884 = vmatpush1.msra.mxu0 0.0
        %885 = vmatprep.subr.mxu0 0.0
        %886 = vmatpush1.msra.mxu0 0.0
        %887 = vmatprep.subr.mxu0 0.0
        %888 = vmatpush1.msra.mxu0 0.0
        %889 = vmatprep.subr.mxu0 0.0
        %890 = vmatpush1.msra.mxu0 0.0
        %891 = vmatprep.subr.mxu0 0.0
        %892 = vmatpush1.msra.mxu0 0.0
        %893 = vmatprep.subr.mxu0 0.0
        %894 = vmatpush1.msra.mxu0 0.0
        %895 = vmatprep.subr.mxu0 0.0
        %896 = vmatpush1.msra.mxu0 0.0
        %897 = vmatprep.subr.mxu0 0.0
        %898 = vmatpush1.msra.mxu0 0.0
        %899 = vmatprep.subr.mxu0 0.0
        %900 = vmatpush1.msra.mxu0 0.0
        %901 = vmatprep.subr.mxu0 0.0
        %902 = vmatpush1.msra.mxu0 0.0
        %903 = vmatprep.subr.mxu0 0.0
        %904 = vmatpush1.msra.mxu0 0.0
        %905 = vmatprep.subr.mxu0 0.0
        %906 = vmatpush1.msra.mxu0 0.0
        %907 = vmatprep.mubr.f32.mxu0 0.0
        %908 = vmatmul.mubr.f32.gmra.mrb[0].mxu0 %v839
        %v909 = vpop.f32.mrb[0].mxu0
        %v910 = vadd.f32 0.0, %v909
        %v911 = vpop.f32.mrb[0].mxu0
        %912 = vmatprep.mubr.f32.mxu0 0.0
        %913 = vmatmul.mubr.f32.gmra.mrb[0].mxu0 %v841
        %v914 = vpop.f32.mrb[0].mxu0
        %v915 = vadd.f32 0.0, %v914
        %v916 = vpop.f32.mrb[0].mxu0
        %917 = vdwg.mxu0
        %v918 = vadd.f32 %v665, %v910
        %v919 = vadd.f32 %v670, %v915
        %s920 = scalar_lea.vmem [#allocation9], 64
        %v921 = vld [vmem:[%s920] sm:$0xff]
        %v922 = vld [vmem:[%s920 + $0x8] sm:$0xff]
        %v923 = vld [vmem:[%s920 + $0x10] sm:$0xff]
        %v924 = vld [vmem:[%s920 + $0x18] sm:$0xff]
        %925 = vmatprep.subr.mxu0 0.0
        %926 = vmatpush1.msra.mxu0 %v921
        %927 = vmatprep.subr.mxu0 0.0
        %928 = vmatpush1.msra.mxu0 %v922
        %929 = vmatprep.subr.mxu0 0.0
        %930 = vmatpush1.msra.mxu0 %v923
        %931 = vmatprep.subr.mxu0 0.0
        %932 = vmatpush1.msra.mxu0 %v924
        %933 = vmatprep.subr.mxu0 0.0
        %934 = vmatpush1.msra.mxu0 0.0
        %935 = vmatprep.subr.mxu0 0.0
        %936 = vmatpush1.msra.mxu0 0.0
        %937 = vmatprep.subr.mxu0 0.0
        %938 = vmatpush1.msra.mxu0 0.0
        %939 = vmatprep.subr.mxu0 0.0
        %940 = vmatpush1.msra.mxu0 0.0
        %941 = vmatprep.subr.mxu0 0.0
        %942 = vmatpush1.msra.mxu0 0.0
        %943 = vmatprep.subr.mxu0 0.0
        %944 = vmatpush1.msra.mxu0 0.0
        %945 = vmatprep.subr.mxu0 0.0
        %946 = vmatpush1.msra.mxu0 0.0
        %947 = vmatprep.subr.mxu0 0.0
        %948 = vmatpush1.msra.mxu0 0.0
        %949 = vmatprep.subr.mxu0 0.0
        %950 = vmatpush1.msra.mxu0 0.0
        %951 = vmatprep.subr.mxu0 0.0
        %952 = vmatpush1.msra.mxu0 0.0
        %953 = vmatprep.subr.mxu0 0.0
        %954 = vmatpush1.msra.mxu0 0.0
        %955 = vmatprep.subr.mxu0 0.0
        %956 = vmatpush1.msra.mxu0 0.0
        %957 = vmatprep.subr.mxu0 0.0
        %958 = vmatpush1.msra.mxu0 0.0
        %959 = vmatprep.subr.mxu0 0.0
        %960 = vmatpush1.msra.mxu0 0.0
        %961 = vmatprep.subr.mxu0 0.0
        %962 = vmatpush1.msra.mxu0 0.0
        %963 = vmatprep.subr.mxu0 0.0
        %964 = vmatpush1.msra.mxu0 0.0
        %965 = vmatprep.subr.mxu0 0.0
        %966 = vmatpush1.msra.mxu0 0.0
        %967 = vmatprep.subr.mxu0 0.0
        %968 = vmatpush1.msra.mxu0 0.0
        %969 = vmatprep.subr.mxu0 0.0
        %970 = vmatpush1.msra.mxu0 0.0
        %971 = vmatprep.subr.mxu0 0.0
        %972 = vmatpush1.msra.mxu0 0.0
        %973 = vmatprep.subr.mxu0 0.0
        %974 = vmatpush1.msra.mxu0 0.0
        %975 = vmatprep.subr.mxu0 0.0
        %976 = vmatpush1.msra.mxu0 0.0
        %977 = vmatprep.subr.mxu0 0.0
        %978 = vmatpush1.msra.mxu0 0.0
        %979 = vmatprep.subr.mxu0 0.0
        %980 = vmatpush1.msra.mxu0 0.0
        %981 = vmatprep.subr.mxu0 0.0
        %982 = vmatpush1.msra.mxu0 0.0
        %983 = vmatprep.subr.mxu0 0.0
        %984 = vmatpush1.msra.mxu0 0.0
        %985 = vmatprep.subr.mxu0 0.0
        %986 = vmatpush1.msra.mxu0 0.0
        %987 = vmatprep.subr.mxu0 0.0
        %988 = vmatpush1.msra.mxu0 0.0
        %989 = vmatprep.mubr.f32.mxu0 0.0
        %990 = vmatmul.mubr.f32.gmra.mrb[0].mxu0 %v839
        %v991 = vpop.f32.mrb[0].mxu0
        %v992 = vadd.f32 0.0, %v991
        %v993 = vpop.f32.mrb[0].mxu0
        %994 = vmatprep.mubr.f32.mxu0 0.0
        %995 = vmatmul.mubr.f32.gmra.mrb[0].mxu0 %v841
        %v996 = vpop.f32.mrb[0].mxu0
        %v997 = vadd.f32 0.0, %v996
        %v998 = vpop.f32.mrb[0].mxu0
        %999 = vdwg.mxu0
        %v1000 = vadd.f32 %v819, %v992
        %v1001 = vadd.f32 %v824, %v997
        %v1002 = vld [vmem:[%s5] sm:$0x1]
        %v1004 = vlaneseq
        %v1005 = vshrl.u32 %v1004, 7
        %v1006 = vsub.s32 0, %v1005
        %v1007 = vrot.slane %v1002, %v1006
        %v1009 = vadd.f32 %v918, %v1007
        %v1010 = vadd.f32 %v919, %v1007
        %v1011 = vld [vmem:[%s6] sm:$0x1]
        %v1013 = vlaneseq
        %v1014 = vshrl.u32 %v1013, 7
        %v1015 = vsub.s32 0, %v1014
        %v1016 = vrot.slane %v1011, %v1015
        %v1018 = vadd.f32 %v1000, %v1016
        %v1019 = vadd.f32 %v1001, %v1016
        %v1020 = vxor.u32 %v1018, 2147483648
        %v1021 = vxor.u32 %v1019, 2147483648
        %v1022 = vmul.f32 %v1020, 1.442695
        %v1023 = vpow.pop %v1022
        %v1024 = vmul.f32 %v1021, 1.442695
        %v1025 = vpow.pop %v1024
        %v1026 = vadd.f32 %v1023, 1.0
        %v1027 = vadd.f32 %v1025, 1.0
        %v1028 = vrcp.pop %v1026
        %v1029 = vmul.f32 1.0, %v1028
        %v1030 = vrcp.pop %v1027
        %v1031 = vmul.f32 1.0, %v1030
        %v1032 = vmul.f32 %v1009, %v1029
        %v1033 = vmul.f32 %v1010, %v1031
        %v1034 = vadd.f32 %v1032, %v480
        %v1035 = vadd.f32 %v1033, %v485
        %v1036 = vmul.f32 %v1034, 0.70710677
        %v1037 = vmul.f32 %v1035, 0.70710677
        %s1038 = scalar_lea.vmem [#allocation8], 128
        %v1039 = vld [vmem:[%s1038] sm:$0xff]
        %v1040 = vld [vmem:[%s1038 + $0x8] sm:$0xff]
        %v1041 = vld [vmem:[%s1038 + $0x10] sm:$0xff]
        %v1042 = vld [vmem:[%s1038 + $0x18] sm:$0xff]
        %s1043 = scalar_lea.vmem [#allocation9], 128
        %v1044 = vld [vmem:[%s1043] sm:$0xff]
        %v1045 = vld [vmem:[%s1043 + $0x8] sm:$0xff]
        %v1046 = vld [vmem:[%s1043 + $0x10] sm:$0xff]
        %v1047 = vld [vmem:[%s1043 + $0x18] sm:$0xff]
        %1048 = vst.msk [vmem:[#allocation2 + $0x1] sm:$0xff] %vm501, %v1036
        %1049 = vst.msk [vmem:[#allocation2 + $0x9] sm:$0xff] %vm501, %v1037
        %v1050 = vld [vmem:[#allocation2] sm:$0xff]
        %v1051 = vld [vmem:[#allocation2 + $0x8] sm:$0xff]
        %v1052 = vld [vmem:[#allocation2 + $0x10] sm:$0x3]
        %s1053 = scalar_lea.vmem [#allocation8], 96
        %v1054 = vld [vmem:[%s1053] sm:$0xff]
        %v1055 = vld [vmem:[%s1053 + $0x8] sm:$0xff]
        %v1056 = vld [vmem:[%s1053 + $0x10] sm:$0xff]
        %v1057 = vld [vmem:[%s1053 + $0x18] sm:$0xff]
        %v1059 = vsel %vm501, %v1050, 0
        %v1062 = vsel %vm501, %v1051, 0
        %1064 = vmatprep.subr.mxu0 0.0
        %1065 = vmatpush1.msra.mxu0 %v1054
        %1066 = vmatprep.subr.mxu0 0.0
        %1067 = vmatpush1.msra.mxu0 %v1055
        %1068 = vmatprep.subr.mxu0 0.0
        %1069 = vmatpush1.msra.mxu0 %v1056
        %1070 = vmatprep.subr.mxu0 0.0
        %1071 = vmatpush1.msra.mxu0 %v1057
        %1072 = vmatprep.subr.mxu0 0.0
        %1073 = vmatpush1.msra.mxu0 0.0
        %1074 = vmatprep.subr.mxu0 0.0
        %1075 = vmatpush1.msra.mxu0 0.0
        %1076 = vmatprep.subr.mxu0 0.0
        %1077 = vmatpush1.msra.mxu0 0.0
        %1078 = vmatprep.subr.mxu0 0.0
        %1079 = vmatpush1.msra.mxu0 0.0
        %1080 = vmatprep.subr.mxu0 0.0
        %1081 = vmatpush1.msra.mxu0 0.0
        %1082 = vmatprep.subr.mxu0 0.0
        %1083 = vmatpush1.msra.mxu0 0.0
        %1084 = vmatprep.subr.mxu0 0.0
        %1085 = vmatpush1.msra.mxu0 0.0
        %1086 = vmatprep.subr.mxu0 0.0
        %1087 = vmatpush1.msra.mxu0 0.0
        %1088 = vmatprep.subr.mxu0 0.0
        %1089 = vmatpush1.msra.mxu0 0.0
        %1090 = vmatprep.subr.mxu0 0.0
        %1091 = vmatpush1.msra.mxu0 0.0
        %1092 = vmatprep.subr.mxu0 0.0
        %1093 = vmatpush1.msra.mxu0 0.0
        %1094 = vmatprep.subr.mxu0 0.0
        %1095 = vmatpush1.msra.mxu0 0.0
        %1096 = vmatprep.subr.mxu0 0.0
        %1097 = vmatpush1.msra.mxu0 0.0
        %1098 = vmatprep.subr.mxu0 0.0
        %1099 = vmatpush1.msra.mxu0 0.0
        %1100 = vmatprep.subr.mxu0 0.0
        %1101 = vmatpush1.msra.mxu0 0.0
        %1102 = vmatprep.subr.mxu0 0.0
        %1103 = vmatpush1.msra.mxu0 0.0
        %1104 = vmatprep.subr.mxu0 0.0
        %1105 = vmatpush1.msra.mxu0 0.0
        %1106 = vmatprep.subr.mxu0 0.0
        %1107 = vmatpush1.msra.mxu0 0.0
        %1108 = vmatprep.subr.mxu0 0.0
        %1109 = vmatpush1.msra.mxu0 0.0
        %1110 = vmatprep.subr.mxu0 0.0
        %1111 = vmatpush1.msra.mxu0 0.0
        %1112 = vmatprep.subr.mxu0 0.0
        %1113 = vmatpush1.msra.mxu0 0.0
        %1114 = vmatprep.subr.mxu0 0.0
        %1115 = vmatpush1.msra.mxu0 0.0
        %1116 = vmatprep.subr.mxu0 0.0
        %1117 = vmatpush1.msra.mxu0 0.0
        %1118 = vmatprep.subr.mxu0 0.0
        %1119 = vmatpush1.msra.mxu0 0.0
        %1120 = vmatprep.subr.mxu0 0.0
        %1121 = vmatpush1.msra.mxu0 0.0
        %1122 = vmatprep.subr.mxu0 0.0
        %1123 = vmatpush1.msra.mxu0 0.0
        %1124 = vmatprep.subr.mxu0 0.0
        %1125 = vmatpush1.msra.mxu0 0.0
        %1126 = vmatprep.subr.mxu0 0.0
        %1127 = vmatpush1.msra.mxu0 0.0
        %1128 = vmatprep.mubr.f32.mxu0 0.0
        %1129 = vmatmul.mubr.f32.gmra.mrb[0].mxu0 %v1059
        %v1130 = vpop.f32.mrb[0].mxu0
        %v1131 = vadd.f32 0.0, %v1130
        %v1132 = vpop.f32.mrb[0].mxu0
        %1133 = vmatprep.mubr.f32.mxu0 0.0
        %1134 = vmatmul.mubr.f32.gmra.mrb[0].mxu0 %v1062
        %v1135 = vpop.f32.mrb[0].mxu0
        %v1136 = vadd.f32 0.0, %v1135
        %v1137 = vpop.f32.mrb[0].mxu0
        %1138 = vdwg.mxu0
        %v1140 = vsel %vm501, %v1036, 0
        %v1143 = vsel %vm501, %v1037, 0
        %1145 = vmatprep.subr.mxu0 0.0
        %1146 = vmatpush1.msra.mxu0 %v1039
        %1147 = vmatprep.subr.mxu0 0.0
        %1148 = vmatpush1.msra.mxu0 %v1040
        %1149 = vmatprep.subr.mxu0 0.0
        %1150 = vmatpush1.msra.mxu0 %v1041
        %1151 = vmatprep.subr.mxu0 0.0
        %1152 = vmatpush1.msra.mxu0 %v1042
        %1153 = vmatprep.subr.mxu0 0.0
        %1154 = vmatpush1.msra.mxu0 0.0
        %1155 = vmatprep.subr.mxu0 0.0
        %1156 = vmatpush1.msra.mxu0 0.0
        %1157 = vmatprep.subr.mxu0 0.0
        %1158 = vmatpush1.msra.mxu0 0.0
        %1159 = vmatprep.subr.mxu0 0.0
        %1160 = vmatpush1.msra.mxu0 0.0
        %1161 = vmatprep.subr.mxu0 0.0
        %1162 = vmatpush1.msra.mxu0 0.0
        %1163 = vmatprep.subr.mxu0 0.0
        %1164 = vmatpush1.msra.mxu0 0.0
        %1165 = vmatprep.subr.mxu0 0.0
        %1166 = vmatpush1.msra.mxu0 0.0
        %1167 = vmatprep.subr.mxu0 0.0
        %1168 = vmatpush1.msra.mxu0 0.0
        %1169 = vmatprep.subr.mxu0 0.0
        %1170 = vmatpush1.msra.mxu0 0.0
        %1171 = vmatprep.subr.mxu0 0.0
        %1172 = vmatpush1.msra.mxu0 0.0
        %1173 = vmatprep.subr.mxu0 0.0
        %1174 = vmatpush1.msra.mxu0 0.0
        %1175 = vmatprep.subr.mxu0 0.0
        %1176 = vmatpush1.msra.mxu0 0.0
        %1177 = vmatprep.subr.mxu0 0.0
        %1178 = vmatpush1.msra.mxu0 0.0
        %1179 = vmatprep.subr.mxu0 0.0
        %1180 = vmatpush1.msra.mxu0 0.0
        %1181 = vmatprep.subr.mxu0 0.0
        %1182 = vmatpush1.msra.mxu0 0.0
        %1183 = vmatprep.subr.mxu0 0.0
        %1184 = vmatpush1.msra.mxu0 0.0
        %1185 = vmatprep.subr.mxu0 0.0
        %1186 = vmatpush1.msra.mxu0 0.0
        %1187 = vmatprep.subr.mxu0 0.0
        %1188 = vmatpush1.msra.mxu0 0.0
        %1189 = vmatprep.subr.mxu0 0.0
        %1190 = vmatpush1.msra.mxu0 0.0
        %1191 = vmatprep.subr.mxu0 0.0
        %1192 = vmatpush1.msra.mxu0 0.0
        %1193 = vmatprep.subr.mxu0 0.0
        %1194 = vmatpush1.msra.mxu0 0.0
        %1195 = vmatprep.subr.mxu0 0.0
        %1196 = vmatpush1.msra.mxu0 0.0
        %1197 = vmatprep.subr.mxu0 0.0
        %1198 = vmatpush1.msra.mxu0 0.0
        %1199 = vmatprep.subr.mxu0 0.0
        %1200 = vmatpush1.msra.mxu0 0.0
        %1201 = vmatprep.subr.mxu0 0.0
        %1202 = vmatpush1.msra.mxu0 0.0
        %1203 = vmatprep.subr.mxu0 0.0
        %1204 = vmatpush1.msra.mxu0 0.0
        %1205 = vmatprep.subr.mxu0 0.0
        %1206 = vmatpush1.msra.mxu0 0.0
        %1207 = vmatprep.subr.mxu0 0.0
        %1208 = vmatpush1.msra.mxu0 0.0
        %1209 = vmatprep.mubr.f32.mxu0 0.0
        %1210 = vmatmul.mubr.f32.gmra.mrb[0].mxu0 %v1140
        %v1211 = vpop.f32.mrb[0].mxu0
        %v1212 = vadd.f32 %v1131, %v1211
        %v1213 = vpop.f32.mrb[0].mxu0
        %1214 = vmatprep.mubr.f32.mxu0 0.0
        %1215 = vmatmul.mubr.f32.gmra.mrb[0].mxu0 %v1143
        %v1216 = vpop.f32.mrb[0].mxu0
        %v1217 = vadd.f32 %v1136, %v1216
        %v1218 = vpop.f32.mrb[0].mxu0
        %1219 = vdwg.mxu0
        %s1220 = scalar_lea.vmem [#allocation9], 96
        %v1221 = vld [vmem:[%s1220] sm:$0xff]
        %v1222 = vld [vmem:[%s1220 + $0x8] sm:$0xff]
        %v1223 = vld [vmem:[%s1220 + $0x10] sm:$0xff]
        %v1224 = vld [vmem:[%s1220 + $0x18] sm:$0xff]
        %1225 = vmatprep.subr.mxu0 0.0
        %1226 = vmatpush1.msra.mxu0 %v1221
        %1227 = vmatprep.subr.mxu0 0.0
        %1228 = vmatpush1.msra.mxu0 %v1222
        %1229 = vmatprep.subr.mxu0 0.0
        %1230 = vmatpush1.msra.mxu0 %v1223
        %1231 = vmatprep.subr.mxu0 0.0
        %1232 = vmatpush1.msra.mxu0 %v1224
        %1233 = vmatprep.subr.mxu0 0.0
        %1234 = vmatpush1.msra.mxu0 0.0
        %1235 = vmatprep.subr.mxu0 0.0
        %1236 = vmatpush1.msra.mxu0 0.0
        %1237 = vmatprep.subr.mxu0 0.0
        %1238 = vmatpush1.msra.mxu0 0.0
        %1239 = vmatprep.subr.mxu0 0.0
        %1240 = vmatpush1.msra.mxu0 0.0
        %1241 = vmatprep.subr.mxu0 0.0
        %1242 = vmatpush1.msra.mxu0 0.0
        %1243 = vmatprep.subr.mxu0 0.0
        %1244 = vmatpush1.msra.mxu0 0.0
        %1245 = vmatprep.subr.mxu0 0.0
        %1246 = vmatpush1.msra.mxu0 0.0
        %1247 = vmatprep.subr.mxu0 0.0
        %1248 = vmatpush1.msra.mxu0 0.0
        %1249 = vmatprep.subr.mxu0 0.0
        %1250 = vmatpush1.msra.mxu0 0.0
        %1251 = vmatprep.subr.mxu0 0.0
        %1252 = vmatpush1.msra.mxu0 0.0
        %1253 = vmatprep.subr.mxu0 0.0
        %1254 = vmatpush1.msra.mxu0 0.0
        %1255 = vmatprep.subr.mxu0 0.0
        %1256 = vmatpush1.msra.mxu0 0.0
        %1257 = vmatprep.subr.mxu0 0.0
        %1258 = vmatpush1.msra.mxu0 0.0
        %1259 = vmatprep.subr.mxu0 0.0
        %1260 = vmatpush1.msra.mxu0 0.0
        %1261 = vmatprep.subr.mxu0 0.0
        %1262 = vmatpush1.msra.mxu0 0.0
        %1263 = vmatprep.subr.mxu0 0.0
        %1264 = vmatpush1.msra.mxu0 0.0
        %1265 = vmatprep.subr.mxu0 0.0
        %1266 = vmatpush1.msra.mxu0 0.0
        %1267 = vmatprep.subr.mxu0 0.0
        %1268 = vmatpush1.msra.mxu0 0.0
        %1269 = vmatprep.subr.mxu0 0.0
        %1270 = vmatpush1.msra.mxu0 0.0
        %1271 = vmatprep.subr.mxu0 0.0
        %1272 = vmatpush1.msra.mxu0 0.0
        %1273 = vmatprep.subr.mxu0 0.0
        %1274 = vmatpush1.msra.mxu0 0.0
        %1275 = vmatprep.subr.mxu0 0.0
        %1276 = vmatpush1.msra.mxu0 0.0
        %1277 = vmatprep.subr.mxu0 0.0
        %1278 = vmatpush1.msra.mxu0 0.0
        %1279 = vmatprep.subr.mxu0 0.0
        %1280 = vmatpush1.msra.mxu0 0.0
        %1281 = vmatprep.subr.mxu0 0.0
        %1282 = vmatpush1.msra.mxu0 0.0
        %1283 = vmatprep.subr.mxu0 0.0
        %1284 = vmatpush1.msra.mxu0 0.0
        %1285 = vmatprep.subr.mxu0 0.0
        %1286 = vmatpush1.msra.mxu0 0.0
        %1287 = vmatprep.subr.mxu0 0.0
        %1288 = vmatpush1.msra.mxu0 0.0
        %1289 = vmatprep.mubr.f32.mxu0 0.0
        %1290 = vmatmul.mubr.f32.gmra.mrb[0].mxu0 %v1059
        %v1291 = vpop.f32.mrb[0].mxu0
        %v1292 = vadd.f32 0.0, %v1291
        %v1293 = vpop.f32.mrb[0].mxu0
        %1294 = vmatprep.mubr.f32.mxu0 0.0
        %1295 = vmatmul.mubr.f32.gmra.mrb[0].mxu0 %v1062
        %v1296 = vpop.f32.mrb[0].mxu0
        %v1297 = vadd.f32 0.0, %v1296
        %v1298 = vpop.f32.mrb[0].mxu0
        %1299 = vdwg.mxu0
        %1300 = vmatprep.subr.mxu0 0.0
        %1301 = vmatpush1.msra.mxu0 %v1044
        %1302 = vmatprep.subr.mxu0 0.0
        %1303 = vmatpush1.msra.mxu0 %v1045
        %1304 = vmatprep.subr.mxu0 0.0
        %1305 = vmatpush1.msra.mxu0 %v1046
        %1306 = vmatprep.subr.mxu0 0.0
        %1307 = vmatpush1.msra.mxu0 %v1047
        %1308 = vmatprep.subr.mxu0 0.0
        %1309 = vmatpush1.msra.mxu0 0.0
        %1310 = vmatprep.subr.mxu0 0.0
        %1311 = vmatpush1.msra.mxu0 0.0
        %1312 = vmatprep.subr.mxu0 0.0
        %1313 = vmatpush1.msra.mxu0 0.0
        %1314 = vmatprep.subr.mxu0 0.0
        %1315 = vmatpush1.msra.mxu0 0.0
        %1316 = vmatprep.subr.mxu0 0.0
        %1317 = vmatpush1.msra.mxu0 0.0
        %1318 = vmatprep.subr.mxu0 0.0
        %1319 = vmatpush1.msra.mxu0 0.0
        %1320 = vmatprep.subr.mxu0 0.0
        %1321 = vmatpush1.msra.mxu0 0.0
        %1322 = vmatprep.subr.mxu0 0.0
        %1323 = vmatpush1.msra.mxu0 0.0
        %1324 = vmatprep.subr.mxu0 0.0
        %1325 = vmatpush1.msra.mxu0 0.0
        %1326 = vmatprep.subr.mxu0 0.0
        %1327 = vmatpush1.msra.mxu0 0.0
        %1328 = vmatprep.subr.mxu0 0.0
        %1329 = vmatpush1.msra.mxu0 0.0
        %1330 = vmatprep.subr.mxu0 0.0
        %1331 = vmatpush1.msra.mxu0 0.0
        %1332 = vmatprep.subr.mxu0 0.0
        %1333 = vmatpush1.msra.mxu0 0.0
        %1334 = vmatprep.subr.mxu0 0.0
        %1335 = vmatpush1.msra.mxu0 0.0
        %1336 = vmatprep.subr.mxu0 0.0
        %1337 = vmatpush1.msra.mxu0 0.0
        %1338 = vmatprep.subr.mxu0 0.0
        %1339 = vmatpush1.msra.mxu0 0.0
        %1340 = vmatprep.subr.mxu0 0.0
        %1341 = vmatpush1.msra.mxu0 0.0
        %1342 = vmatprep.subr.mxu0 0.0
        %1343 = vmatpush1.msra.mxu0 0.0
        %1344 = vmatprep.subr.mxu0 0.0
        %1345 = vmatpush1.msra.mxu0 0.0
        %1346 = vmatprep.subr.mxu0 0.0
        %1347 = vmatpush1.msra.mxu0 0.0
        %1348 = vmatprep.subr.mxu0 0.0
        %1349 = vmatpush1.msra.mxu0 0.0
        %1350 = vmatprep.subr.mxu0 0.0
        %1351 = vmatpush1.msra.mxu0 0.0
        %1352 = vmatprep.subr.mxu0 0.0
        %1353 = vmatpush1.msra.mxu0 0.0
        %1354 = vmatprep.subr.mxu0 0.0
        %1355 = vmatpush1.msra.mxu0 0.0
        %1356 = vmatprep.subr.mxu0 0.0
        %1357 = vmatpush1.msra.mxu0 0.0
        %1358 = vmatprep.subr.mxu0 0.0
        %1359 = vmatpush1.msra.mxu0 0.0
        %1360 = vmatprep.subr.mxu0 0.0
        %1361 = vmatpush1.msra.mxu0 0.0
        %1362 = vmatprep.subr.mxu0 0.0
        %1363 = vmatpush1.msra.mxu0 0.0
        %1364 = vmatprep.mubr.f32.mxu0 0.0
        %1365 = vmatmul.mubr.f32.gmra.mrb[0].mxu0 %v1140
        %v1366 = vpop.f32.mrb[0].mxu0
        %v1367 = vadd.f32 %v1292, %v1366
        %v1368 = vpop.f32.mrb[0].mxu0
        %1369 = vmatprep.mubr.f32.mxu0 0.0
        %1370 = vmatmul.mubr.f32.gmra.mrb[0].mxu0 %v1143
        %v1371 = vpop.f32.mrb[0].mxu0
        %v1372 = vadd.f32 %v1297, %v1371
        %v1373 = vpop.f32.mrb[0].mxu0
        %1374 = vdwg.mxu0
        %s1375 = scalar_lea.vmem [#allocation8], 160
        %v1376 = vld [vmem:[%s1375] sm:$0xff]
        %v1377 = vld [vmem:[%s1375 + $0x8] sm:$0xff]
        %v1378 = vld [vmem:[%s1375 + $0x10] sm:$0xff]
        %v1379 = vld [vmem:[%s1375 + $0x18] sm:$0xff]
        %v1381 = vrot.slane %v1050, 2
        %v1382 = vrot.slane %v1051, 2
        %v1383 = vsel %vm833, %v1381, %v1382
        %v1384 = vrot.slane %v1052, 2
        %v1385 = vsel %vm833, %v1382, %v1384
        %v1386 = vsel %vm501, %v1383, 0
        %v1388 = vsel %vm501, %v1385, 0
        %1390 = vmatprep.subr.mxu0 0.0
        %1391 = vmatpush1.msra.mxu0 %v1376
        %1392 = vmatprep.subr.mxu0 0.0
        %1393 = vmatpush1.msra.mxu0 %v1377
        %1394 = vmatprep.subr.mxu0 0.0
        %1395 = vmatpush1.msra.mxu0 %v1378
        %1396 = vmatprep.subr.mxu0 0.0
        %1397 = vmatpush1.msra.mxu0 %v1379
        %1398 = vmatprep.subr.mxu0 0.0
        %1399 = vmatpush1.msra.mxu0 0.0
        %1400 = vmatprep.subr.mxu0 0.0
        %1401 = vmatpush1.msra.mxu0 0.0
        %1402 = vmatprep.subr.mxu0 0.0
        %1403 = vmatpush1.msra.mxu0 0.0
        %1404 = vmatprep.subr.mxu0 0.0
        %1405 = vmatpush1.msra.mxu0 0.0
        %1406 = vmatprep.subr.mxu0 0.0
        %1407 = vmatpush1.msra.mxu0 0.0
        %1408 = vmatprep.subr.mxu0 0.0
        %1409 = vmatpush1.msra.mxu0 0.0
        %1410 = vmatprep.subr.mxu0 0.0
        %1411 = vmatpush1.msra.mxu0 0.0
        %1412 = vmatprep.subr.mxu0 0.0
        %1413 = vmatpush1.msra.mxu0 0.0
        %1414 = vmatprep.subr.mxu0 0.0
        %1415 = vmatpush1.msra.mxu0 0.0
        %1416 = vmatprep.subr.mxu0 0.0
        %1417 = vmatpush1.msra.mxu0 0.0
        %1418 = vmatprep.subr.mxu0 0.0
        %1419 = vmatpush1.msra.mxu0 0.0
        %1420 = vmatprep.subr.mxu0 0.0
        %1421 = vmatpush1.msra.mxu0 0.0
        %1422 = vmatprep.subr.mxu0 0.0
        %1423 = vmatpush1.msra.mxu0 0.0
        %1424 = vmatprep.subr.mxu0 0.0
        %1425 = vmatpush1.msra.mxu0 0.0
        %1426 = vmatprep.subr.mxu0 0.0
        %1427 = vmatpush1.msra.mxu0 0.0
        %1428 = vmatprep.subr.mxu0 0.0
        %1429 = vmatpush1.msra.mxu0 0.0
        %1430 = vmatprep.subr.mxu0 0.0
        %1431 = vmatpush1.msra.mxu0 0.0
        %1432 = vmatprep.subr.mxu0 0.0
        %1433 = vmatpush1.msra.mxu0 0.0
        %1434 = vmatprep.subr.mxu0 0.0
        %1435 = vmatpush1.msra.mxu0 0.0
        %1436 = vmatprep.subr.mxu0 0.0
        %1437 = vmatpush1.msra.mxu0 0.0
        %1438 = vmatprep.subr.mxu0 0.0
        %1439 = vmatpush1.msra.mxu0 0.0
        %1440 = vmatprep.subr.mxu0 0.0
        %1441 = vmatpush1.msra.mxu0 0.0
        %1442 = vmatprep.subr.mxu0 0.0
        %1443 = vmatpush1.msra.mxu0 0.0
        %1444 = vmatprep.subr.mxu0 0.0
        %1445 = vmatpush1.msra.mxu0 0.0
        %1446 = vmatprep.subr.mxu0 0.0
        %1447 = vmatpush1.msra.mxu0 0.0
        %1448 = vmatprep.subr.mxu0 0.0
        %1449 = vmatpush1.msra.mxu0 0.0
        %1450 = vmatprep.subr.mxu0 0.0
        %1451 = vmatpush1.msra.mxu0 0.0
        %1452 = vmatprep.subr.mxu0 0.0
        %1453 = vmatpush1.msra.mxu0 0.0
        %1454 = vmatprep.mubr.f32.mxu0 0.0
        %1455 = vmatmul.mubr.f32.gmra.mrb[0].mxu0 %v1386
        %v1456 = vpop.f32.mrb[0].mxu0
        %v1457 = vadd.f32 0.0, %v1456
        %v1458 = vpop.f32.mrb[0].mxu0
        %1459 = vmatprep.mubr.f32.mxu0 0.0
        %1460 = vmatmul.mubr.f32.gmra.mrb[0].mxu0 %v1388
        %v1461 = vpop.f32.mrb[0].mxu0
        %v1462 = vadd.f32 0.0, %v1461
        %v1463 = vpop.f32.mrb[0].mxu0
        %1464 = vdwg.mxu0
        %v1465 = vadd.f32 %v1212, %v1457
        %v1466 = vadd.f32 %v1217, %v1462
        %s1467 = scalar_lea.vmem [#allocation9], 160
        %v1468 = vld [vmem:[%s1467] sm:$0xff]
        %v1469 = vld [vmem:[%s1467 + $0x8] sm:$0xff]
        %v1470 = vld [vmem:[%s1467 + $0x10] sm:$0xff]
        %v1471 = vld [vmem:[%s1467 + $0x18] sm:$0xff]
        %1472 = vmatprep.subr.mxu0 0.0
        %1473 = vmatpush1.msra.mxu0 %v1468
        %1474 = vmatprep.subr.mxu0 0.0
        %1475 = vmatpush1.msra.mxu0 %v1469
        %1476 = vmatprep.subr.mxu0 0.0
        %1477 = vmatpush1.msra.mxu0 %v1470
        %1478 = vmatprep.subr.mxu0 0.0
        %1479 = vmatpush1.msra.mxu0 %v1471
        %1480 = vmatprep.subr.mxu0 0.0
        %1481 = vmatpush1.msra.mxu0 0.0
        %1482 = vmatprep.subr.mxu0 0.0
        %1483 = vmatpush1.msra.mxu0 0.0
        %1484 = vmatprep.subr.mxu0 0.0
        %1485 = vmatpush1.msra.mxu0 0.0
        %1486 = vmatprep.subr.mxu0 0.0
        %1487 = vmatpush1.msra.mxu0 0.0
        %1488 = vmatprep.subr.mxu0 0.0
        %1489 = vmatpush1.msra.mxu0 0.0
        %1490 = vmatprep.subr.mxu0 0.0
        %1491 = vmatpush1.msra.mxu0 0.0
        %1492 = vmatprep.subr.mxu0 0.0
        %1493 = vmatpush1.msra.mxu0 0.0
        %1494 = vmatprep.subr.mxu0 0.0
        %1495 = vmatpush1.msra.mxu0 0.0
        %1496 = vmatprep.subr.mxu0 0.0
        %1497 = vmatpush1.msra.mxu0 0.0
        %1498 = vmatprep.subr.mxu0 0.0
        %1499 = vmatpush1.msra.mxu0 0.0
        %1500 = vmatprep.subr.mxu0 0.0
        %1501 = vmatpush1.msra.mxu0 0.0
        %1502 = vmatprep.subr.mxu0 0.0
        %1503 = vmatpush1.msra.mxu0 0.0
        %1504 = vmatprep.subr.mxu0 0.0
        %1505 = vmatpush1.msra.mxu0 0.0
        %1506 = vmatprep.subr.mxu0 0.0
        %1507 = vmatpush1.msra.mxu0 0.0
        %1508 = vmatprep.subr.mxu0 0.0
        %1509 = vmatpush1.msra.mxu0 0.0
        %1510 = vmatprep.subr.mxu0 0.0
        %1511 = vmatpush1.msra.mxu0 0.0
        %1512 = vmatprep.subr.mxu0 0.0
        %1513 = vmatpush1.msra.mxu0 0.0
        %1514 = vmatprep.subr.mxu0 0.0
        %1515 = vmatpush1.msra.mxu0 0.0
        %1516 = vmatprep.subr.mxu0 0.0
        %1517 = vmatpush1.msra.mxu0 0.0
        %1518 = vmatprep.subr.mxu0 0.0
        %1519 = vmatpush1.msra.mxu0 0.0
        %1520 = vmatprep.subr.mxu0 0.0
        %1521 = vmatpush1.msra.mxu0 0.0
        %1522 = vmatprep.subr.mxu0 0.0
        %1523 = vmatpush1.msra.mxu0 0.0
        %1524 = vmatprep.subr.mxu0 0.0
        %1525 = vmatpush1.msra.mxu0 0.0
        %1526 = vmatprep.subr.mxu0 0.0
        %1527 = vmatpush1.msra.mxu0 0.0
        %1528 = vmatprep.subr.mxu0 0.0
        %1529 = vmatpush1.msra.mxu0 0.0
        %1530 = vmatprep.subr.mxu0 0.0
        %1531 = vmatpush1.msra.mxu0 0.0
        %1532 = vmatprep.subr.mxu0 0.0
        %1533 = vmatpush1.msra.mxu0 0.0
        %1534 = vmatprep.subr.mxu0 0.0
        %1535 = vmatpush1.msra.mxu0 0.0
        %1536 = vmatprep.mubr.f32.mxu0 0.0
        %1537 = vmatmul.mubr.f32.gmra.mrb[0].mxu0 %v1386
        %v1538 = vpop.f32.mrb[0].mxu0
        %v1539 = vadd.f32 0.0, %v1538
        %v1540 = vpop.f32.mrb[0].mxu0
        %1541 = vmatprep.mubr.f32.mxu0 0.0
        %1542 = vmatmul.mubr.f32.gmra.mrb[0].mxu0 %v1388
        %v1543 = vpop.f32.mrb[0].mxu0
        %v1544 = vadd.f32 0.0, %v1543
        %v1545 = vpop.f32.mrb[0].mxu0
        %1546 = vdwg.mxu0
        %v1547 = vadd.f32 %v1367, %v1539
        %v1548 = vadd.f32 %v1372, %v1544
        %s1549 = scalar_lea.vmem %s5, 1
        %v1550 = vld [vmem:[%s1549] sm:$0x1]
        %v1552 = vlaneseq
        %v1553 = vshrl.u32 %v1552, 7
        %v1554 = vsub.s32 0, %v1553
        %v1555 = vrot.slane %v1550, %v1554
        %v1557 = vadd.f32 %v1465, %v1555
        %v1558 = vadd.f32 %v1466, %v1555
        %s1559 = scalar_lea.vmem %s6, 1
        %v1560 = vld [vmem:[%s1559] sm:$0x1]
        %v1562 = vlaneseq
        %v1563 = vshrl.u32 %v1562, 7
        %v1564 = vsub.s32 0, %v1563
        %v1565 = vrot.slane %v1560, %v1564
        %v1567 = vadd.f32 %v1547, %v1565
        %v1568 = vadd.f32 %v1548, %v1565
        %v1569 = vxor.u32 %v1567, 2147483648
        %v1570 = vxor.u32 %v1568, 2147483648
        %v1571 = vmul.f32 %v1569, 1.442695
        %v1572 = vpow.pop %v1571
        %v1573 = vmul.f32 %v1570, 1.442695
        %v1574 = vpow.pop %v1573
        %v1575 = vadd.f32 %v1572, 1.0
        %v1576 = vadd.f32 %v1574, 1.0
        %v1577 = vrcp.pop %v1575
        %v1578 = vmul.f32 1.0, %v1577
        %v1579 = vrcp.pop %v1576
        %v1580 = vmul.f32 1.0, %v1579
        %v1581 = vmul.f32 %v1557, %v1578
        %v1582 = vmul.f32 %v1558, %v1580
        %v1583 = vadd.f32 %v1581, %v1036
        %v1584 = vadd.f32 %v1582, %v1037
        %v1585 = vmul.f32 %v1583, 0.70710677
        %v1586 = vmul.f32 %v1584, 0.70710677
        %s1587 = scalar_lea.vmem [#allocation8], 224
        %v1588 = vld [vmem:[%s1587] sm:$0xff]
        %v1589 = vld [vmem:[%s1587 + $0x8] sm:$0xff]
        %v1590 = vld [vmem:[%s1587 + $0x10] sm:$0xff]
        %v1591 = vld [vmem:[%s1587 + $0x18] sm:$0xff]
        %s1592 = scalar_lea.vmem [#allocation9], 224
        %v1593 = vld [vmem:[%s1592] sm:$0xff]
        %v1594 = vld [vmem:[%s1592 + $0x8] sm:$0xff]
        %v1595 = vld [vmem:[%s1592 + $0x10] sm:$0xff]
        %v1596 = vld [vmem:[%s1592 + $0x18] sm:$0xff]
        %1597 = vst.msk [vmem:[#allocation2 + $0x1] sm:$0xff] %vm501, %v1585
        %1598 = vst.msk [vmem:[#allocation2 + $0x9] sm:$0xff] %vm501, %v1586
        %v1599 = vld [vmem:[#allocation2] sm:$0xff]
        %v1600 = vld [vmem:[#allocation2 + $0x8] sm:$0xff]
        %v1601 = vld [vmem:[#allocation2 + $0x10] sm:$0x3]
        %s1602 = scalar_lea.vmem [#allocation8], 192
        %v1603 = vld [vmem:[%s1602] sm:$0xff]
        %v1604 = vld [vmem:[%s1602 + $0x8] sm:$0xff]
        %v1605 = vld [vmem:[%s1602 + $0x10] sm:$0xff]
        %v1606 = vld [vmem:[%s1602 + $0x18] sm:$0xff]
        %v1608 = vsel %vm501, %v1599, 0
        %v1611 = vsel %vm501, %v1600, 0
        %1613 = vmatprep.subr.mxu0 0.0
        %1614 = vmatpush1.msra.mxu0 %v1603
        %1615 = vmatprep.subr.mxu0 0.0
        %1616 = vmatpush1.msra.mxu0 %v1604
        %1617 = vmatprep.subr.mxu0 0.0
        %1618 = vmatpush1.msra.mxu0 %v1605
        %1619 = vmatprep.subr.mxu0 0.0
        %1620 = vmatpush1.msra.mxu0 %v1606
        %1621 = vmatprep.subr.mxu0 0.0
        %1622 = vmatpush1.msra.mxu0 0.0
        %1623 = vmatprep.subr.mxu0 0.0
        %1624 = vmatpush1.msra.mxu0 0.0
        %1625 = vmatprep.subr.mxu0 0.0
        %1626 = vmatpush1.msra.mxu0 0.0
        %1627 = vmatprep.subr.mxu0 0.0
        %1628 = vmatpush1.msra.mxu0 0.0
        %1629 = vmatprep.subr.mxu0 0.0
        %1630 = vmatpush1.msra.mxu0 0.0
        %1631 = vmatprep.subr.mxu0 0.0
        %1632 = vmatpush1.msra.mxu0 0.0
        %1633 = vmatprep.subr.mxu0 0.0
        %1634 = vmatpush1.msra.mxu0 0.0
        %1635 = vmatprep.subr.mxu0 0.0
        %1636 = vmatpush1.msra.mxu0 0.0
        %1637 = vmatprep.subr.mxu0 0.0
        %1638 = vmatpush1.msra.mxu0 0.0
        %1639 = vmatprep.subr.mxu0 0.0
        %1640 = vmatpush1.msra.mxu0 0.0
        %1641 = vmatprep.subr.mxu0 0.0
        %1642 = vmatpush1.msra.mxu0 0.0
        %1643 = vmatprep.subr.mxu0 0.0
        %1644 = vmatpush1.msra.mxu0 0.0
        %1645 = vmatprep.subr.mxu0 0.0
        %1646 = vmatpush1.msra.mxu0 0.0
        %1647 = vmatprep.subr.mxu0 0.0
        %1648 = vmatpush1.msra.mxu0 0.0
        %1649 = vmatprep.subr.mxu0 0.0
        %1650 = vmatpush1.msra.mxu0 0.0
        %1651 = vmatprep.subr.mxu0 0.0
        %1652 = vmatpush1.msra.mxu0 0.0
        %1653 = vmatprep.subr.mxu0 0.0
        %1654 = vmatpush1.msra.mxu0 0.0
        %1655 = vmatprep.subr.mxu0 0.0
        %1656 = vmatpush1.msra.mxu0 0.0
        %1657 = vmatprep.subr.mxu0 0.0
        %1658 = vmatpush1.msra.mxu0 0.0
        %1659 = vmatprep.subr.mxu0 0.0
        %1660 = vmatpush1.msra.mxu0 0.0
        %1661 = vmatprep.subr.mxu0 0.0
        %1662 = vmatpush1.msra.mxu0 0.0
        %1663 = vmatprep.subr.mxu0 0.0
        %1664 = vmatpush1.msra.mxu0 0.0
        %1665 = vmatprep.subr.mxu0 0.0
        %1666 = vmatpush1.msra.mxu0 0.0
        %1667 = vmatprep.subr.mxu0 0.0
        %1668 = vmatpush1.msra.mxu0 0.0
        %1669 = vmatprep.subr.mxu0 0.0
        %1670 = vmatpush1.msra.mxu0 0.0
        %1671 = vmatprep.subr.mxu0 0.0
        %1672 = vmatpush1.msra.mxu0 0.0
        %1673 = vmatprep.subr.mxu0 0.0
        %1674 = vmatpush1.msra.mxu0 0.0
        %1675 = vmatprep.subr.mxu0 0.0
        %1676 = vmatpush1.msra.mxu0 0.0
        %1677 = vmatprep.mubr.f32.mxu0 0.0
        %1678 = vmatmul.mubr.f32.gmra.mrb[0].mxu0 %v1608
        %v1679 = vpop.f32.mrb[0].mxu0
        %v1680 = vadd.f32 0.0, %v1679
        %v1681 = vpop.f32.mrb[0].mxu0
        %1682 = vmatprep.mubr.f32.mxu0 0.0
        %1683 = vmatmul.mubr.f32.gmra.mrb[0].mxu0 %v1611
        %v1684 = vpop.f32.mrb[0].mxu0
        %v1685 = vadd.f32 0.0, %v1684
        %v1686 = vpop.f32.mrb[0].mxu0
        %1687 = vdwg.mxu0
        %v1689 = vsel %vm501, %v1585, 0
        %v1692 = vsel %vm501, %v1586, 0
        %1694 = vmatprep.subr.mxu0 0.0
        %1695 = vmatpush1.msra.mxu0 %v1588
        %1696 = vmatprep.subr.mxu0 0.0
        %1697 = vmatpush1.msra.mxu0 %v1589
        %1698 = vmatprep.subr.mxu0 0.0
        %1699 = vmatpush1.msra.mxu0 %v1590
        %1700 = vmatprep.subr.mxu0 0.0
        %1701 = vmatpush1.msra.mxu0 %v1591
        %1702 = vmatprep.subr.mxu0 0.0
        %1703 = vmatpush1.msra.mxu0 0.0
        %1704 = vmatprep.subr.mxu0 0.0
        %1705 = vmatpush1.msra.mxu0 0.0
        %1706 = vmatprep.subr.mxu0 0.0
        %1707 = vmatpush1.msra.mxu0 0.0
        %1708 = vmatprep.subr.mxu0 0.0
        %1709 = vmatpush1.msra.mxu0 0.0
        %1710 = vmatprep.subr.mxu0 0.0
        %1711 = vmatpush1.msra.mxu0 0.0
        %1712 = vmatprep.subr.mxu0 0.0
        %1713 = vmatpush1.msra.mxu0 0.0
        %1714 = vmatprep.subr.mxu0 0.0
        %1715 = vmatpush1.msra.mxu0 0.0
        %1716 = vmatprep.subr.mxu0 0.0
        %1717 = vmatpush1.msra.mxu0 0.0
        %1718 = vmatprep.subr.mxu0 0.0
        %1719 = vmatpush1.msra.mxu0 0.0
        %1720 = vmatprep.subr.mxu0 0.0
        %1721 = vmatpush1.msra.mxu0 0.0
        %1722 = vmatprep.subr.mxu0 0.0
        %1723 = vmatpush1.msra.mxu0 0.0
        %1724 = vmatprep.subr.mxu0 0.0
        %1725 = vmatpush1.msra.mxu0 0.0
        %1726 = vmatprep.subr.mxu0 0.0
        %1727 = vmatpush1.msra.mxu0 0.0
        %1728 = vmatprep.subr.mxu0 0.0
        %1729 = vmatpush1.msra.mxu0 0.0
        %1730 = vmatprep.subr.mxu0 0.0
        %1731 = vmatpush1.msra.mxu0 0.0
        %1732 = vmatprep.subr.mxu0 0.0
        %1733 = vmatpush1.msra.mxu0 0.0
        %1734 = vmatprep.subr.mxu0 0.0
        %1735 = vmatpush1.msra.mxu0 0.0
        %1736 = vmatprep.subr.mxu0 0.0
        %1737 = vmatpush1.msra.mxu0 0.0
        %1738 = vmatprep.subr.mxu0 0.0
        %1739 = vmatpush1.msra.mxu0 0.0
        %1740 = vmatprep.subr.mxu0 0.0
        %1741 = vmatpush1.msra.mxu0 0.0
        %1742 = vmatprep.subr.mxu0 0.0
        %1743 = vmatpush1.msra.mxu0 0.0
        %1744 = vmatprep.subr.mxu0 0.0
        %1745 = vmatpush1.msra.mxu0 0.0
        %1746 = vmatprep.subr.mxu0 0.0
        %1747 = vmatpush1.msra.mxu0 0.0
        %1748 = vmatprep.subr.mxu0 0.0
        %1749 = vmatpush1.msra.mxu0 0.0
        %1750 = vmatprep.subr.mxu0 0.0
        %1751 = vmatpush1.msra.mxu0 0.0
        %1752 = vmatprep.subr.mxu0 0.0
        %1753 = vmatpush1.msra.mxu0 0.0
        %1754 = vmatprep.subr.mxu0 0.0
        %1755 = vmatpush1.msra.mxu0 0.0
        %1756 = vmatprep.subr.mxu0 0.0
        %1757 = vmatpush1.msra.mxu0 0.0
        %1758 = vmatprep.mubr.f32.mxu0 0.0
        %1759 = vmatmul.mubr.f32.gmra.mrb[0].mxu0 %v1689
        %v1760 = vpop.f32.mrb[0].mxu0
        %v1761 = vadd.f32 %v1680, %v1760
        %v1762 = vpop.f32.mrb[0].mxu0
        %1763 = vmatprep.mubr.f32.mxu0 0.0
        %1764 = vmatmul.mubr.f32.gmra.mrb[0].mxu0 %v1692
        %v1765 = vpop.f32.mrb[0].mxu0
        %v1766 = vadd.f32 %v1685, %v1765
        %v1767 = vpop.f32.mrb[0].mxu0
        %1768 = vdwg.mxu0
        %s1769 = scalar_lea.vmem [#allocation9], 192
        %v1770 = vld [vmem:[%s1769] sm:$0xff]
        %v1771 = vld [vmem:[%s1769 + $0x8] sm:$0xff]
        %v1772 = vld [vmem:[%s1769 + $0x10] sm:$0xff]
        %v1773 = vld [vmem:[%s1769 + $0x18] sm:$0xff]
        %1774 = vmatprep.subr.mxu0 0.0
        %1775 = vmatpush1.msra.mxu0 %v1770
        %1776 = vmatprep.subr.mxu0 0.0
        %1777 = vmatpush1.msra.mxu0 %v1771
        %1778 = vmatprep.subr.mxu0 0.0
        %1779 = vmatpush1.msra.mxu0 %v1772
        %1780 = vmatprep.subr.mxu0 0.0
        %1781 = vmatpush1.msra.mxu0 %v1773
        %1782 = vmatprep.subr.mxu0 0.0
        %1783 = vmatpush1.msra.mxu0 0.0
        %1784 = vmatprep.subr.mxu0 0.0
        %1785 = vmatpush1.msra.mxu0 0.0
        %1786 = vmatprep.subr.mxu0 0.0
        %1787 = vmatpush1.msra.mxu0 0.0
        %1788 = vmatprep.subr.mxu0 0.0
        %1789 = vmatpush1.msra.mxu0 0.0
        %1790 = vmatprep.subr.mxu0 0.0
        %1791 = vmatpush1.msra.mxu0 0.0
        %1792 = vmatprep.subr.mxu0 0.0
        %1793 = vmatpush1.msra.mxu0 0.0
        %1794 = vmatprep.subr.mxu0 0.0
        %1795 = vmatpush1.msra.mxu0 0.0
        %1796 = vmatprep.subr.mxu0 0.0
        %1797 = vmatpush1.msra.mxu0 0.0
        %1798 = vmatprep.subr.mxu0 0.0
        %1799 = vmatpush1.msra.mxu0 0.0
        %1800 = vmatprep.subr.mxu0 0.0
        %1801 = vmatpush1.msra.mxu0 0.0
        %1802 = vmatprep.subr.mxu0 0.0
        %1803 = vmatpush1.msra.mxu0 0.0
        %1804 = vmatprep.subr.mxu0 0.0
        %1805 = vmatpush1.msra.mxu0 0.0
        %1806 = vmatprep.subr.mxu0 0.0
        %1807 = vmatpush1.msra.mxu0 0.0
        %1808 = vmatprep.subr.mxu0 0.0
        %1809 = vmatpush1.msra.mxu0 0.0
        %1810 = vmatprep.subr.mxu0 0.0
        %1811 = vmatpush1.msra.mxu0 0.0
        %1812 = vmatprep.subr.mxu0 0.0
        %1813 = vmatpush1.msra.mxu0 0.0
        %1814 = vmatprep.subr.mxu0 0.0
        %1815 = vmatpush1.msra.mxu0 0.0
        %1816 = vmatprep.subr.mxu0 0.0
        %1817 = vmatpush1.msra.mxu0 0.0
        %1818 = vmatprep.subr.mxu0 0.0
        %1819 = vmatpush1.msra.mxu0 0.0
        %1820 = vmatprep.subr.mxu0 0.0
        %1821 = vmatpush1.msra.mxu0 0.0
        %1822 = vmatprep.subr.mxu0 0.0
        %1823 = vmatpush1.msra.mxu0 0.0
        %1824 = vmatprep.subr.mxu0 0.0
        %1825 = vmatpush1.msra.mxu0 0.0
        %1826 = vmatprep.subr.mxu0 0.0
        %1827 = vmatpush1.msra.mxu0 0.0
        %1828 = vmatprep.subr.mxu0 0.0
        %1829 = vmatpush1.msra.mxu0 0.0
        %1830 = vmatprep.subr.mxu0 0.0
        %1831 = vmatpush1.msra.mxu0 0.0
        %1832 = vmatprep.subr.mxu0 0.0
        %1833 = vmatpush1.msra.mxu0 0.0
        %1834 = vmatprep.subr.mxu0 0.0
        %1835 = vmatpush1.msra.mxu0 0.0
        %1836 = vmatprep.subr.mxu0 0.0
        %1837 = vmatpush1.msra.mxu0 0.0
        %1838 = vmatprep.mubr.f32.mxu0 0.0
        %1839 = vmatmul.mubr.f32.gmra.mrb[0].mxu0 %v1608
        %v1840 = vpop.f32.mrb[0].mxu0
        %v1841 = vadd.f32 0.0, %v1840
        %v1842 = vpop.f32.mrb[0].mxu0
        %1843 = vmatprep.mubr.f32.mxu0 0.0
        %1844 = vmatmul.mubr.f32.gmra.mrb[0].mxu0 %v1611
        %v1845 = vpop.f32.mrb[0].mxu0
        %v1846 = vadd.f32 0.0, %v1845
        %v1847 = vpop.f32.mrb[0].mxu0
        %1848 = vdwg.mxu0
        %1849 = vmatprep.subr.mxu0 0.0
        %1850 = vmatpush1.msra.mxu0 %v1593
        %1851 = vmatprep.subr.mxu0 0.0
        %1852 = vmatpush1.msra.mxu0 %v1594
        %1853 = vmatprep.subr.mxu0 0.0
        %1854 = vmatpush1.msra.mxu0 %v1595
        %1855 = vmatprep.subr.mxu0 0.0
        %1856 = vmatpush1.msra.mxu0 %v1596
        %1857 = vmatprep.subr.mxu0 0.0
        %1858 = vmatpush1.msra.mxu0 0.0
        %1859 = vmatprep.subr.mxu0 0.0
        %1860 = vmatpush1.msra.mxu0 0.0
        %1861 = vmatprep.subr.mxu0 0.0
        %1862 = vmatpush1.msra.mxu0 0.0
        %1863 = vmatprep.subr.mxu0 0.0
        %1864 = vmatpush1.msra.mxu0 0.0
        %1865 = vmatprep.subr.mxu0 0.0
        %1866 = vmatpush1.msra.mxu0 0.0
        %1867 = vmatprep.subr.mxu0 0.0
        %1868 = vmatpush1.msra.mxu0 0.0
        %1869 = vmatprep.subr.mxu0 0.0
        %1870 = vmatpush1.msra.mxu0 0.0
        %1871 = vmatprep.subr.mxu0 0.0
        %1872 = vmatpush1.msra.mxu0 0.0
        %1873 = vmatprep.subr.mxu0 0.0
        %1874 = vmatpush1.msra.mxu0 0.0
        %1875 = vmatprep.subr.mxu0 0.0
        %1876 = vmatpush1.msra.mxu0 0.0
        %1877 = vmatprep.subr.mxu0 0.0
        %1878 = vmatpush1.msra.mxu0 0.0
        %1879 = vmatprep.subr.mxu0 0.0
        %1880 = vmatpush1.msra.mxu0 0.0
        %1881 = vmatprep.subr.mxu0 0.0
        %1882 = vmatpush1.msra.mxu0 0.0
        %1883 = vmatprep.subr.mxu0 0.0
        %1884 = vmatpush1.msra.mxu0 0.0
        %1885 = vmatprep.subr.mxu0 0.0
        %1886 = vmatpush1.msra.mxu0 0.0
        %1887 = vmatprep.subr.mxu0 0.0
        %1888 = vmatpush1.msra.mxu0 0.0
        %1889 = vmatprep.subr.mxu0 0.0
        %1890 = vmatpush1.msra.mxu0 0.0
        %1891 = vmatprep.subr.mxu0 0.0
        %1892 = vmatpush1.msra.mxu0 0.0
        %1893 = vmatprep.subr.mxu0 0.0
        %1894 = vmatpush1.msra.mxu0 0.0
        %1895 = vmatprep.subr.mxu0 0.0
        %1896 = vmatpush1.msra.mxu0 0.0
        %1897 = vmatprep.subr.mxu0 0.0
        %1898 = vmatpush1.msra.mxu0 0.0
        %1899 = vmatprep.subr.mxu0 0.0
        %1900 = vmatpush1.msra.mxu0 0.0
        %1901 = vmatprep.subr.mxu0 0.0
        %1902 = vmatpush1.msra.mxu0 0.0
        %1903 = vmatprep.subr.mxu0 0.0
        %1904 = vmatpush1.msra.mxu0 0.0
        %1905 = vmatprep.subr.mxu0 0.0
        %1906 = vmatpush1.msra.mxu0 0.0
        %1907 = vmatprep.subr.mxu0 0.0
        %1908 = vmatpush1.msra.mxu0 0.0
        %1909 = vmatprep.subr.mxu0 0.0
        %1910 = vmatpush1.msra.mxu0 0.0
        %1911 = vmatprep.subr.mxu0 0.0
        %1912 = vmatpush1.msra.mxu0 0.0
        %1913 = vmatprep.mubr.f32.mxu0 0.0
        %1914 = vmatmul.mubr.f32.gmra.mrb[0].mxu0 %v1689
        %v1915 = vpop.f32.mrb[0].mxu0
        %v1916 = vadd.f32 %v1841, %v1915
        %v1917 = vpop.f32.mrb[0].mxu0
        %1918 = vmatprep.mubr.f32.mxu0 0.0
        %1919 = vmatmul.mubr.f32.gmra.mrb[0].mxu0 %v1692
        %v1920 = vpop.f32.mrb[0].mxu0
        %v1921 = vadd.f32 %v1846, %v1920
        %v1922 = vpop.f32.mrb[0].mxu0
        %1923 = vdwg.mxu0
        %s1924 = scalar_lea.vmem [#allocation8], 256
        %v1925 = vld [vmem:[%s1924] sm:$0xff]
        %v1926 = vld [vmem:[%s1924 + $0x8] sm:$0xff]
        %v1927 = vld [vmem:[%s1924 + $0x10] sm:$0xff]
        %v1928 = vld [vmem:[%s1924 + $0x18] sm:$0xff]
        %v1930 = vrot.slane %v1599, 2
        %v1931 = vrot.slane %v1600, 2
        %v1932 = vsel %vm833, %v1930, %v1931
        %v1933 = vrot.slane %v1601, 2
        %v1934 = vsel %vm833, %v1931, %v1933
        %v1935 = vsel %vm501, %v1932, 0
        %v1937 = vsel %vm501, %v1934, 0
        %1939 = vmatprep.subr.mxu0 0.0
        %1940 = vmatpush1.msra.mxu0 %v1925
        %1941 = vmatprep.subr.mxu0 0.0
        %1942 = vmatpush1.msra.mxu0 %v1926
        %1943 = vmatprep.subr.mxu0 0.0
        %1944 = vmatpush1.msra.mxu0 %v1927
        %1945 = vmatprep.subr.mxu0 0.0
        %1946 = vmatpush1.msra.mxu0 %v1928
        %1947 = vmatprep.subr.mxu0 0.0
        %1948 = vmatpush1.msra.mxu0 0.0
        %1949 = vmatprep.subr.mxu0 0.0
        %1950 = vmatpush1.msra.mxu0 0.0
        %1951 = vmatprep.subr.mxu0 0.0
        %1952 = vmatpush1.msra.mxu0 0.0
        %1953 = vmatprep.subr.mxu0 0.0
        %1954 = vmatpush1.msra.mxu0 0.0
        %1955 = vmatprep.subr.mxu0 0.0
        %1956 = vmatpush1.msra.mxu0 0.0
        %1957 = vmatprep.subr.mxu0 0.0
        %1958 = vmatpush1.msra.mxu0 0.0
        %1959 = vmatprep.subr.mxu0 0.0
        %1960 = vmatpush1.msra.mxu0 0.0
        %1961 = vmatprep.subr.mxu0 0.0
        %1962 = vmatpush1.msra.mxu0 0.0
        %1963 = vmatprep.subr.mxu0 0.0
        %1964 = vmatpush1.msra.mxu0 0.0
        %1965 = vmatprep.subr.mxu0 0.0
        %1966 = vmatpush1.msra.mxu0 0.0
        %1967 = vmatprep.subr.mxu0 0.0
        %1968 = vmatpush1.msra.mxu0 0.0
        %1969 = vmatprep.subr.mxu0 0.0
        %1970 = vmatpush1.msra.mxu0 0.0
        %1971 = vmatprep.subr.mxu0 0.0
        %1972 = vmatpush1.msra.mxu0 0.0
        %1973 = vmatprep.subr.mxu0 0.0
        %1974 = vmatpush1.msra.mxu0 0.0
        %1975 = vmatprep.subr.mxu0 0.0
        %1976 = vmatpush1.msra.mxu0 0.0
        %1977 = vmatprep.subr.mxu0 0.0
        %1978 = vmatpush1.msra.mxu0 0.0
        %1979 = vmatprep.subr.mxu0 0.0
        %1980 = vmatpush1.msra.mxu0 0.0
        %1981 = vmatprep.subr.mxu0 0.0
        %1982 = vmatpush1.msra.mxu0 0.0
        %1983 = vmatprep.subr.mxu0 0.0
        %1984 = vmatpush1.msra.mxu0 0.0
        %1985 = vmatprep.subr.mxu0 0.0
        %1986 = vmatpush1.msra.mxu0 0.0
        %1987 = vmatprep.subr.mxu0 0.0
        %1988 = vmatpush1.msra.mxu0 0.0
        %1989 = vmatprep.subr.mxu0 0.0
        %1990 = vmatpush1.msra.mxu0 0.0
        %1991 = vmatprep.subr.mxu0 0.0
        %1992 = vmatpush1.msra.mxu0 0.0
        %1993 = vmatprep.subr.mxu0 0.0
        %1994 = vmatpush1.msra.mxu0 0.0
        %1995 = vmatprep.subr.mxu0 0.0
        %1996 = vmatpush1.msra.mxu0 0.0
        %1997 = vmatprep.subr.mxu0 0.0
        %1998 = vmatpush1.msra.mxu0 0.0
        %1999 = vmatprep.subr.mxu0 0.0
        %2000 = vmatpush1.msra.mxu0 0.0
        %2001 = vmatprep.subr.mxu0 0.0
        %2002 = vmatpush1.msra.mxu0 0.0
        %2003 = vmatprep.mubr.f32.mxu0 0.0
        %2004 = vmatmul.mubr.f32.gmra.mrb[0].mxu0 %v1935
        %v2005 = vpop.f32.mrb[0].mxu0
        %v2006 = vadd.f32 0.0, %v2005
        %v2007 = vpop.f32.mrb[0].mxu0
        %2008 = vmatprep.mubr.f32.mxu0 0.0
        %2009 = vmatmul.mubr.f32.gmra.mrb[0].mxu0 %v1937
        %v2010 = vpop.f32.mrb[0].mxu0
        %v2011 = vadd.f32 0.0, %v2010
        %v2012 = vpop.f32.mrb[0].mxu0
        %2013 = vdwg.mxu0
        %v2014 = vadd.f32 %v1761, %v2006
        %v2015 = vadd.f32 %v1766, %v2011
        %s2016 = scalar_lea.vmem [#allocation9], 256
        %v2017 = vld [vmem:[%s2016] sm:$0xff]
        %v2018 = vld [vmem:[%s2016 + $0x8] sm:$0xff]
        %v2019 = vld [vmem:[%s2016 + $0x10] sm:$0xff]
        %v2020 = vld [vmem:[%s2016 + $0x18] sm:$0xff]
        %2021 = vmatprep.subr.mxu0 0.0
        %2022 = vmatpush1.msra.mxu0 %v2017
        %2023 = vmatprep.subr.mxu0 0.0
        %2024 = vmatpush1.msra.mxu0 %v2018
        %2025 = vmatprep.subr.mxu0 0.0
        %2026 = vmatpush1.msra.mxu0 %v2019
        %2027 = vmatprep.subr.mxu0 0.0
        %2028 = vmatpush1.msra.mxu0 %v2020
        %2029 = vmatprep.subr.mxu0 0.0
        %2030 = vmatpush1.msra.mxu0 0.0
        %2031 = vmatprep.subr.mxu0 0.0
        %2032 = vmatpush1.msra.mxu0 0.0
        %2033 = vmatprep.subr.mxu0 0.0
        %2034 = vmatpush1.msra.mxu0 0.0
        %2035 = vmatprep.subr.mxu0 0.0
        %2036 = vmatpush1.msra.mxu0 0.0
        %2037 = vmatprep.subr.mxu0 0.0
        %2038 = vmatpush1.msra.mxu0 0.0
        %2039 = vmatprep.subr.mxu0 0.0
        %2040 = vmatpush1.msra.mxu0 0.0
        %2041 = vmatprep.subr.mxu0 0.0
        %2042 = vmatpush1.msra.mxu0 0.0
        %2043 = vmatprep.subr.mxu0 0.0
        %2044 = vmatpush1.msra.mxu0 0.0
        %2045 = vmatprep.subr.mxu0 0.0
        %2046 = vmatpush1.msra.mxu0 0.0
        %2047 = vmatprep.subr.mxu0 0.0
        %2048 = vmatpush1.msra.mxu0 0.0
        %2049 = vmatprep.subr.mxu0 0.0
        %2050 = vmatpush1.msra.mxu0 0.0
        %2051 = vmatprep.subr.mxu0 0.0
        %2052 = vmatpush1.msra.mxu0 0.0
        %2053 = vmatprep.subr.mxu0 0.0
        %2054 = vmatpush1.msra.mxu0 0.0
        %2055 = vmatprep.subr.mxu0 0.0
        %2056 = vmatpush1.msra.mxu0 0.0
        %2057 = vmatprep.subr.mxu0 0.0
        %2058 = vmatpush1.msra.mxu0 0.0
        %2059 = vmatprep.subr.mxu0 0.0
        %2060 = vmatpush1.msra.mxu0 0.0
        %2061 = vmatprep.subr.mxu0 0.0
        %2062 = vmatpush1.msra.mxu0 0.0
        %2063 = vmatprep.subr.mxu0 0.0
        %2064 = vmatpush1.msra.mxu0 0.0
        %2065 = vmatprep.subr.mxu0 0.0
        %2066 = vmatpush1.msra.mxu0 0.0
        %2067 = vmatprep.subr.mxu0 0.0
        %2068 = vmatpush1.msra.mxu0 0.0
        %2069 = vmatprep.subr.mxu0 0.0
        %2070 = vmatpush1.msra.mxu0 0.0
        %2071 = vmatprep.subr.mxu0 0.0
        %2072 = vmatpush1.msra.mxu0 0.0
        %2073 = vmatprep.subr.mxu0 0.0
        %2074 = vmatpush1.msra.mxu0 0.0
        %2075 = vmatprep.subr.mxu0 0.0
        %2076 = vmatpush1.msra.mxu0 0.0
        %2077 = vmatprep.subr.mxu0 0.0
        %2078 = vmatpush1.msra.mxu0 0.0
        %2079 = vmatprep.subr.mxu0 0.0
        %2080 = vmatpush1.msra.mxu0 0.0
        %2081 = vmatprep.subr.mxu0 0.0
        %2082 = vmatpush1.msra.mxu0 0.0
        %2083 = vmatprep.subr.mxu0 0.0
        %2084 = vmatpush1.msra.mxu0 0.0
        %2085 = vmatprep.mubr.f32.mxu0 0.0
        %2086 = vmatmul.mubr.f32.gmra.mrb[0].mxu0 %v1935
        %v2087 = vpop.f32.mrb[0].mxu0
        %v2088 = vadd.f32 0.0, %v2087
        %v2089 = vpop.f32.mrb[0].mxu0
        %2090 = vmatprep.mubr.f32.mxu0 0.0
        %2091 = vmatmul.mubr.f32.gmra.mrb[0].mxu0 %v1937
        %v2092 = vpop.f32.mrb[0].mxu0
        %v2093 = vadd.f32 0.0, %v2092
        %v2094 = vpop.f32.mrb[0].mxu0
        %2095 = vdwg.mxu0
        %v2096 = vadd.f32 %v1916, %v2088
        %v2097 = vadd.f32 %v1921, %v2093
        %s2098 = scalar_lea.vmem %s5, 2
        %v2099 = vld [vmem:[%s2098] sm:$0x1]
        %v2101 = vlaneseq
        %v2102 = vshrl.u32 %v2101, 7
        %v2103 = vsub.s32 0, %v2102
        %v2104 = vrot.slane %v2099, %v2103
        %v2106 = vadd.f32 %v2014, %v2104
        %v2107 = vadd.f32 %v2015, %v2104
        %s2108 = scalar_lea.vmem %s6, 2
        %v2109 = vld [vmem:[%s2108] sm:$0x1]
        %v2111 = vlaneseq
        %v2112 = vshrl.u32 %v2111, 7
        %v2113 = vsub.s32 0, %v2112
        %v2114 = vrot.slane %v2109, %v2113
        %v2116 = vadd.f32 %v2096, %v2114
        %v2117 = vadd.f32 %v2097, %v2114
        %v2118 = vxor.u32 %v2116, 2147483648
        %v2119 = vxor.u32 %v2117, 2147483648
        %v2120 = vmul.f32 %v2118, 1.442695
        %v2121 = vpow.pop %v2120
        %v2122 = vmul.f32 %v2119, 1.442695
        %v2123 = vpow.pop %v2122
        %v2124 = vadd.f32 %v2121, 1.0
        %v2125 = vadd.f32 %v2123, 1.0
        %v2126 = vrcp.pop %v2124
        %v2127 = vmul.f32 1.0, %v2126
        %v2128 = vrcp.pop %v2125
        %v2129 = vmul.f32 1.0, %v2128
        %v2130 = vmul.f32 %v2106, %v2127
        %v2131 = vmul.f32 %v2107, %v2129
        %v2132 = vadd.f32 %v2130, %v1585
        %v2133 = vadd.f32 %v2131, %v1586
        %v2134 = vmul.f32 %v2132, 0.70710677
        %v2135 = vmul.f32 %v2133, 0.70710677
        %v2136 = vsel %vm501, %v2134, 0.0
        %2137 = vadd.xlane.f32.xlu0 %v2136
        %v2138 = vpop.xlane.xlu0 %2137
        %v2139 = vsel %vm501, %v2135, 0.0
        %2140 = vadd.xlane.f32.xlu0 %v2139
        %v2141 = vpop.xlane.xlu0 %2140
        %v2142 = vmul.f32 %v2134, %v2134
        %v2143 = vmul.f32 %v2135, %v2135
        %v2144 = vsel %vm501, %v2142, 0.0
        %2145 = vadd.xlane.f32.xlu0 %v2144
        %v2146 = vpop.xlane.xlu0 %2145
        %v2147 = vsel %vm501, %v2143, 0.0
        %2148 = vadd.xlane.f32.xlu0 %v2147
        %v2149 = vpop.xlane.xlu0 %2148
        %v2150 = vmul.f32 %v2138, 0.03125
        %v2151 = vmul.f32 %v2141, 0.03125
        %v2152 = vmul.f32 %v2146, 0.03125
        %v2153 = vmul.f32 %v2149, 0.03125
        %v2154 = vmul.f32 %v2150, %v2150
        %v2155 = vmul.f32 %v2151, %v2151
        %v2156 = vsub.f32 %v2152, %v2154
        %v2157 = vsub.f32 %v2153, %v2155
        %v2158 = vmax.f32 %v2156, 0.0
        %v2159 = vmax.f32 %v2157, 0.0
        %v2160 = vsub.f32 %v2134, %v2150
        %v2161 = vsub.f32 %v2135, %v2151
        %v2162 = vadd.f32 %v2158, 1e-05
        %v2163 = vadd.f32 %v2159, 1e-05
        %v2164 = vrsqrt.pop %v2162
        %v2165 = vrsqrt.pop %v2163
        %v2166 = vmul.f32 %v2160, %v2164
        %v2167 = vmul.f32 %v2161, %v2165
        %v2168 = vld [vmem:[%s7] sm:$0x1]
        %v2170 = vlaneseq
        %v2171 = vshrl.u32 %v2170, 7
        %v2172 = vsub.s32 0, %v2171
        %v2173 = vrot.slane %v2168, %v2172
        %v2175 = vmul.f32 %v2166, %v2173
        %v2176 = vmul.f32 %v2167, %v2173
        %v2177 = vld [vmem:[%s8] sm:$0x1]
        %v2179 = vlaneseq
        %v2180 = vshrl.u32 %v2179, 7
        %v2181 = vsub.s32 0, %v2180
        %v2182 = vrot.slane %v2177, %v2181
        %v2184 = vadd.f32 %v2175, %v2182
        %v2185 = vadd.f32 %v2176, %v2182
        %2186 = vst.msk [vmem:[%s394] sm:$0xff] %vm501, %v2184
        %2187 = vst.msk [vmem:[%s394 + $0x8] sm:$0xff] %vm501, %v2185
        %s2188 = sand.u32 %s230, 1
        %s2189 = scalar_lea.sflag [#allocation5], %s2188
        %s2190 = sand.u32 %s230, 1
        %s2191 = smul.addr %s2190, 16
        %s2192 = scalar_lea.vmem [#allocation11], %s2191
        // Predicated region
        $region73: #{tpu_custom_call.1} parent=55 // pred_check
          %p2193 = pneg %p240
        $region74: #{tpu_custom_call.1} parent=55 // pred_check_branch
          %2195 = sbr.rel (%p2193) target = $region76
        $region75: #{tpu_custom_call.1} parent=55 // pred_region
          %s2197 = ssub.s32 256, 256
          %2198 = vsyncadd %s2189, %s2197
          %s2199 = smul.addr %s28, 2
          %s2200 = smul.addr %s2199, 128
          %s2201 = scalar_lea.hbm %s9, %s2200
          %s2202 = sshll.u32 %s2192, 4
          %s2203 = int_to_ptr.vmem [resolvable:$true] %s2202
          %2208 = dma.vmem_to_hbm [thread:$0]  %s2203, 256, %s2201, %s2189, 128, 128, 8
        $region76: #{tpu_custom_call.1} parent=55 // pred_fallthru
          _
      $region56: #{tpu_custom_call.1} parent=5 // pred_fallthru
        _
      %p2209 = scmp.le.s32.totalorder 2, %s23
      // Predicated region
      $region77: #{tpu_custom_call.1} parent=5 // pred_check
        %p2210 = pneg %p2209
      $region78: #{tpu_custom_call.1} parent=5 // pred_check_branch
        %2212 = sbr.rel (%p2210) target = $region80
      $region79: #{tpu_custom_call.1} parent=5 // pred_region
        %s2213 = ssub.s32 %s23, 2
        // Predicated region
        $region81: #{tpu_custom_call.1} parent=79 // pred_check
          %p2214 = pneg %p246
        $region82: #{tpu_custom_call.1} parent=79 // pred_check_branch
          %2216 = sbr.rel (%p2214) target = $region84
        $region83: #{tpu_custom_call.1} parent=79 // pred_region
          %s2217 = sand.u32 %s231, 1
          %s2218 = scalar_lea.sflag [#allocation5], %s2217
          %s2219 = sand.u32 %s231, 1
          %s2220 = smul.addr %s2219, 16
          %s2221 = scalar_lea.vmem [#allocation11], %s2220
          %2222 = dma.done %s2218, 256
        $region84: #{tpu_custom_call.1} parent=79 // pred_fallthru
          _
      $region80: #{tpu_custom_call.1} parent=5 // pred_fallthru
        _
    $region6: #{tpu_custom_call.1} parent=1 // loop_footer
      %s27 = sadd.s32 1, %s23
    $region7: #{tpu_custom_call.1} parent=1 // loop_footer_branch
      %22 = sbr.rel target = $region3
    $region8: #{tpu_custom_call.1} parent=1 // loop_exit
      _
    %2223 = vsyncpa [#allocation4], 1
    %s2224 = scalar_lea.sflag [#allocation4], 1
    %2225 = vsyncpa %s2224, 1
    %2226 = vsyncpa [#allocation7], 1
    %2227 = vsyncpa [#allocation10], 1
    %2228 = vsyncpa [#allocation5], 1
    %s2229 = scalar_lea.sflag [#allocation5], 1
    %2230 = vsyncpa %s2229, 1

</llo_original>
